<compile_context>
chip_gen: v6e
topology: v6e:2x2x1
jax: 0.10.0
libtpu: 0.0.40
codegen_flags: <defaults>
</compile_context>

<pallas_src>
import numpy as np
import jax
import jax.numpy as jnp
from jax import lax
from jax.experimental import pallas as pl
from jax.experimental.pallas import tpu as pltpu

_LANE = 128
_SUB = 8
_MAX_COLS = 4096   # lane-columns per grid step per stream (8*4096 = 32768 elems/step)


def _round_up(x, m):
    return ((x + m - 1) // m) * m


def _stream_tiling(n):
    """#elements -> (tile_cols, n_tiles, padded_num_elements)."""
    cols = _round_up(max(1, (n + _SUB - 1) // _SUB), _LANE)
    t = min(_MAX_COLS, cols)
    nt = (cols + t - 1) // t
    return t, nt, _SUB * nt * t


# ----------------------------------------------------------------------------
# Fused kernel (built as a closure over the static tiling parameters)
# ----------------------------------------------------------------------------
def _make_kernel(n_inner, nt_line, nt_rgb, nt_grad):
    def kernel(line_ref, rgb_ref, grad_ref, jloc_ref, jglob_ref, kinv_ref,
               scal_ref, jcost_ref,
               a_num1, a_cnt1, a_num2, a_cnt2, a_rgb, a_eik):
        """line_ref : (14, 8, Tl) planes 0-3 pred, 4-7 gt, 8-11 pred_calib,
                       12 weight, 13 valid-mask
           rgb_ref  : (6, 8, Tr)  planes 0-2 rgb, 3-5 rgb_gt
           grad_ref : (3, 8, Tg)
           jloc_ref : (J1p, 8)  cols 0-2 j3d, 3-4 j2d_calib, 5-6 j2d, 7 pad
           jglob_ref: (8, J2p)  same layout, transposed
           kinv_ref : (3, 3) SMEM
           scal_ref : (8, 128) per-core raw sums in row 0, lanes
                      [num1, cnt1, num2, cnt2, rgb_abs_sum, eik_sum]
           jcost_ref: (4, J1p, J2p) stacked [combined, cost3, cost2_calib, cost2_u]
           a_*      : dense (8, T*) VMEM accumulators (plain '+=' per tile)
        """
        cpid = pl.program_id(0)
        ipid = pl.program_id(1)
        t = cpid * n_inner + ipid

        # --------------------------- init (per core) ---------------------------
        @pl.when(ipid == 0)
        def _init():
            a_num1[...] = jnp.zeros_like(a_num1)
            a_cnt1[...] = jnp.zeros_like(a_cnt1)
            a_num2[...] = jnp.zeros_like(a_num2)
            a_cnt2[...] = jnp.zeros_like(a_cnt2)
            a_rgb[...] = jnp.zeros_like(a_rgb)
            a_eik[...] = jnp.zeros_like(a_eik)

            # Junction L1 cost matrices (tiny; each core writes its own copy).
            aj = jloc_ref[...]          # (J1p, 8)
            bj = jglob_ref[...]         # (8, J2p)

            def cdist(lo, hi):
                acc = jnp.abs(aj[:, lo:lo + 1] - bj[lo:lo + 1, :])
                for d in range(lo + 1, hi):
                    acc = acc + jnp.abs(aj[:, d:d + 1] - bj[d:d + 1, :])
                return acc

            c3 = cdist(0, 3)
            c2c = cdist(3, 5)
            c2u = cdist(5, 7)
            jcost_ref[0, :, :] = c3 + 0.1 * c2c
            jcost_ref[1, :, :] = c3
            jcost_ref[2, :, :] = c2c
            jcost_ref[3, :, :] = c2u

        # --------------------------- line stream -------------------------------
        @pl.when(t < nt_line)
        def _lines():
            p0 = line_ref[0]; p1 = line_ref[1]; p2 = line_ref[2]; p3 = line_ref[3]
            g0 = line_ref[4]; g1 = line_ref[5]; g2 = line_ref[6]; g3 = line_ref[7]
            q0 = line_ref[8]; q1 = line_ref[9]; q2 = line_ref[10]; q3 = line_ref[11]
            w = line_ref[12]; valid = line_ref[13]

            # uncalibrated: pick endpoint orientation per line (tie -> swapped)
            da0 = p0 - g0; da1 = p1 - g1; da2 = p2 - g2; da3 = p3 - g3
            db0 = p0 - g2; db1 = p1 - g3; db2 = p2 - g0; db3 = p3 - g1
            d1 = da0 * da0 + da1 * da1 + da2 * da2 + da3 * da3
            d2 = db0 * db0 + db1 * db1 + db2 * db2 + db3 * db3
            pa = 0.25 * (jnp.abs(da0) + jnp.abs(da1) + jnp.abs(da2) + jnp.abs(da3))
            pb = 0.25 * (jnp.abs(db0) + jnp.abs(db1) + jnp.abs(db2) + jnp.abs(db3))
            per1 = jnp.where(d1 < d2, pa, pb)
            lab1 = jnp.where(per1 < 100.0, valid, 0.0)
            wl1 = w * lab1

            # calibrate GT endpoints with K^-1 (exact reciprocal, one per endpoint)
            k00 = kinv_ref[0, 0]; k01 = kinv_ref[0, 1]; k02 = kinv_ref[0, 2]
            k10 = kinv_ref[1, 0]; k11 = kinv_ref[1, 1]; k12 = kinv_ref[1, 2]
            k20 = kinv_ref[2, 0]; k21 = kinv_ref[2, 1]; k22 = kinv_ref[2, 2]

            inv1 = pl.reciprocal(k20 * g0 + k21 * g1 + k22)
            cx1 = (k00 * g0 + k01 * g1 + k02) * inv1
            cy1 = (k10 * g0 + k11 * g1 + k12) * inv1
            inv2 = pl.reciprocal(k20 * g2 + k21 * g3 + k22)
            cx2 = (k00 * g2 + k01 * g3 + k02) * inv2
            cy2 = (k10 * g2 + k11 * g3 + k12) * inv2

            ea0 = q0 - cx1; ea1 = q1 - cy1; ea2 = q2 - cx2; ea3 = q3 - cy2
            eb0 = q0 - cx2; eb1 = q1 - cy2; eb2 = q2 - cx1; eb3 = q3 - cy1
            f1 = ea0 * ea0 + ea1 * ea1 + ea2 * ea2 + ea3 * ea3
            f2 = eb0 * eb0 + eb1 * eb1 + eb2 * eb2 + eb3 * eb3
            qa = 0.25 * (jnp.abs(ea0) + jnp.abs(ea1) + jnp.abs(ea2) + jnp.abs(ea3))
            qb = 0.25 * (jnp.abs(eb0) + jnp.abs(eb1) + jnp.abs(eb2) + jnp.abs(eb3))
            per2 = jnp.where(f1 < f2, qa, qb)
            per2 = jnp.where(valid > 0.0, per2, 0.0)    # padded lanes contribute 0
            lab2 = jnp.where(per2 < 100.0, valid, 0.0)

            a_num1[...] += per1 * wl1
            a_cnt1[...] += lab1
            a_num2[...] += per2 * wl1 * lab2
            a_cnt2[...] += lab2

        # --------------------------- rgb stream ---------------------------------
        @pl.when(t < nt_rgb)
        def _rgb():
            a_rgb[...] += (jnp.abs(rgb_ref[0] - rgb_ref[3])
                           + jnp.abs(rgb_ref[1] - rgb_ref[4])
                           + jnp.abs(rgb_ref[2] - rgb_ref[5]))

        # --------------------------- eikonal stream -----------------------------
        @pl.when(t < nt_grad)
        def _grad():
            g0 = grad_ref[0]; g1 = grad_ref[1]; g2 = grad_ref[2]
            nrm = jnp.sqrt(g0 * g0 + g1 * g1 + g2 * g2)
            a_eik[...] += (nrm - 1.0) ** 2

        # --------------------------- finalize (per core) ------------------------
        @pl.when(ipid == n_inner - 1)
        def _fin():
            lane = lax.broadcasted_iota(jnp.int32, (_SUB, _LANE), 1)

            def total(ref):                      # (8, T) -> (1, 1) (done once)
                s = jnp.sum(ref[...], axis=1, keepdims=True)
                return jnp.sum(s, axis=0, keepdims=True)

            def at_lane(j, v):
                return jnp.where(lane == j, v, 0.0)

            scal_ref[...] = (at_lane(0, total(a_num1)) + at_lane(1, total(a_cnt1))
                             + at_lane(2, total(a_num2)) + at_lane(3, total(a_cnt2))
                             + at_lane(4, total(a_rgb)) + at_lane(5, total(a_eik)))

    return kernel


# ----------------------------------------------------------------------------
# Jitted wrapper around the single fused pallas_call
# ----------------------------------------------------------------------------
@jax.jit
def _volsdf_forward(lines2d, lines2d_gt, lines_weight, lines2d_calib,
                    rgb_values, rgb_gt, grad_theta, K,
                    j3d_l, j3d_g, j2d_lc, j2d_gc, j2d_l, j2d_g):
    f32 = jnp.float32
    n_lines = lines2d.shape[0]
    n_rgb = rgb_values.shape[0]
    n_grad = grad_theta.shape[0]
    j1 = j3d_l.shape[0]
    j2 = j3d_g.shape[0]

    # per-stream tiling (decoupled extents)
    t_line, nt_line, L_line = _stream_tiling(n_lines)
    t_rgb, nt_rgb, L_rgb = _stream_tiling(n_rgb)
    t_grad, nt_grad, L_grad = _stream_tiling(n_grad)
    max_tiles = max(nt_line, nt_rgb, nt_grad)
    n_inner = (max_tiles + 1) // 2           # leading axis of size 2 (v7x megacore)
    grid = (2, n_inner)

    # TODO(synk): if the XLA-side repack shows up in profiles for very large
    # batches, pass the raw (N,C) arrays with memory_space=pl.ANY and assemble the
    # (C,8,cols) layout in-kernel via manual DMA instead.
    def pack(cols_mat, total_len):           # (n, C) -> (C, 8, total_len//8)
        x = cols_mat.T
        x = jnp.pad(x, ((0, 0), (0, total_len - x.shape[1])))
        return x.reshape(x.shape[0], _SUB, total_len // _SUB)

    line_cols = jnp.concatenate(
        [lines2d.astype(f32), lines2d_gt.astype(f32), lines2d_calib.astype(f32),
         lines_weight.astype(f32), jnp.ones((n_lines, 1), f32)], axis=1)   # (N, 14)
    line_slab = pack(line_cols, L_line)                                    # (14,8,·)

    rgb_cols = jnp.concatenate([rgb_values.astype(f32), rgb_gt.astype(f32)], axis=1)
    rgb_slab = pack(rgb_cols, L_rgb)                                       # (6,8,·)

    grad_t = grad_theta.astype(f32).T                                      # (3, M)
    gpad = L_grad - n_grad
    if gpad > 0:
        # pad with (1,0,0): unit norm -> zero eikonal contribution
        pad_cols = jnp.broadcast_to(jnp.array([[1.0], [0.0], [0.0]], f32), (3, gpad))
        grad_t = jnp.concatenate([grad_t, pad_cols], axis=1)
    grad_slab = grad_t.reshape(3, _SUB, L_grad // _SUB)                    # (3,8,·)

    # junction slabs, padded to lane-dense output blocks
    j1p = max(_SUB, _round_up(j1, _SUB))
    j2p = max(_LANE, _round_up(j2, _LANE))
    jloc = jnp.concatenate([j3d_l.astype(f32), j2d_lc.astype(f32),
                            j2d_l.astype(f32), jnp.zeros((j1, 1), f32)], axis=1)
    jloc = jnp.pad(jloc, ((0, j1p - j1), (0, 0)))                          # (J1p, 8)
    jglob = jnp.concatenate([j3d_g.astype(f32), j2d_gc.astype(f32),
                             j2d_g.astype(f32), jnp.zeros((j2, 1), f32)], axis=1).T
    jglob = jnp.pad(jglob, ((0, 0), (0, j2p - j2)))                        # (8, J2p)

    kinv = jnp.linalg.inv(K.astype(f32))

    kernel = _make_kernel(n_inner, nt_line, nt_rgb, nt_grad)

    grid_spec = pltpu.PrefetchScalarGridSpec(
        num_scalar_prefetch=0,
        grid=grid,
        in_specs=[
            pl.BlockSpec((14, _SUB, t_line),
                         lambda c, i: (0, 0, jnp.minimum(c * n_inner + i, nt_line - 1))),
            pl.BlockSpec((6, _SUB, t_rgb),
                         lambda c, i: (0, 0, jnp.minimum(c * n_inner + i, nt_rgb - 1))),
            pl.BlockSpec((3, _SUB, t_grad),
                         lambda c, i: (0, 0, jnp.minimum(c * n_inner + i, nt_grad - 1))),
            pl.BlockSpec((j1p, 8), lambda c, i: (0, 0)),
            pl.BlockSpec((8, j2p), lambda c, i: (0, 0)),
            pl.BlockSpec(memory_space=pltpu.MemorySpace.SMEM),     # K^-1 scalars
        ],
        out_specs=(
            pl.BlockSpec((None, _SUB, _LANE), lambda c, i: (c, 0, 0)),
            pl.BlockSpec((None, 4, j1p, j2p), lambda c, i: (c, 0, 0, 0)),
        ),
        scratch_shapes=[
            pltpu.VMEM((_SUB, t_line), jnp.float32),   # num1
            pltpu.VMEM((_SUB, t_line), jnp.float32),   # cnt1
            pltpu.VMEM((_SUB, t_line), jnp.float32),   # num2
            pltpu.VMEM((_SUB, t_line), jnp.float32),   # cnt2
            pltpu.VMEM((_SUB, t_rgb), jnp.float32),    # rgb abs sum
            pltpu.VMEM((_SUB, t_grad), jnp.float32),   # eikonal sum
        ],
    )

    scal, costs = pl.pallas_call(
        kernel,
        out_shape=(jax.ShapeDtypeStruct((2, _SUB, _LANE), f32),
                   jax.ShapeDtypeStruct((2, 4, j1p, j2p), f32)),
        grid_spec=grid_spec,
        compiler_params=pltpu.CompilerParams(
            dimension_semantics=("parallel", "arbitrary"),
            vmem_limit_bytes=32 * 1024 * 1024),
    )(line_slab, rgb_slab, grad_slab, jloc, jglob, kinv)

    # combine per-core raw sums and normalize (tiny scalar work)
    tot = scal[0, 0, :] + scal[1, 0, :]
    num1, cnt1, num2, cnt2, rgb_sum, eik_sum = (tot[0], tot[1], tot[2],
                                                tot[3], tot[4], tot[5])
    l2d = num1 / jnp.maximum(cnt1, 1.0)
    line_c = num2 / jnp.maximum(cnt2, 1.0)
    rgb_l = rgb_sum * (1.0 / float(3 * n_rgb))
    eik_l = eik_sum * (1.0 / float(n_grad))
    scalars = jnp.stack([l2d, line_c, rgb_l, eik_l, cnt1])
    return scalars, costs[0, :, :j1, :j2]


# ----------------------------------------------------------------------------
# Host-side assignment (no Pallas equivalent)
# ----------------------------------------------------------------------------
def _linear_sum_assignment(cost_np):
    try:
        from scipy.optimize import linear_sum_assignment
        return linear_sum_assignment(cost_np)
    except Exception:
        # TODO(synk): Hungarian matching (scipy.linear_sum_assignment) has no clean
        # Pallas equivalent; greedy fallback used only when scipy is unavailable.
        c = np.array(cost_np, copy=True).astype(np.float64)
        k = min(c.shape)
        rows, cols = [], []
        for _ in range(k):
            i, j = np.unravel_index(np.argmin(c), c.shape)
            rows.append(int(i)); cols.append(int(j))
            c[i, :] = np.inf; c[:, j] = np.inf
        order = np.argsort(rows)
        return np.array(rows)[order], np.array(cols)[order]


# ----------------------------------------------------------------------------
# VolSDFLoss (forward) wrapper
# ----------------------------------------------------------------------------
class VolSDFLossPallas:
    def __init__(self, rgb_loss='L1', eikonal_weight=0.1, line_weight=0.01,
                 junction_3d_weight=0.1, junction_2d_weight=0.01):
        # rgb_loss fixed to L1(reduction='mean') (standard VolSDF config)
        self.eikonal_weight = float(eikonal_weight)
        self.line_weight = float(line_weight)
        self.junction_3d_weight = float(junction_3d_weight)
        self.junction_2d_weight = float(junction_2d_weight)
        self.steps = 0

    def __call__(self, model_outputs, ground_truth):
        self.steps += 1
        f32 = jnp.float32

        gt_lines = ground_truth['lines2d'][0]                    # (N, 5)
        lines2d_gt = gt_lines[:, :4]
        lines_weight = gt_lines[:, 4:5]
        if 'labels' in ground_truth:
            lines_weight = lines_weight * ground_truth['labels'][0][:, None]

        lines2d = model_outputs['lines2d'].reshape(-1, 4)
        lines2d_calib = model_outputs['lines2d_calib'].reshape(-1, 4)
        rgb_gt = ground_truth['rgb'].reshape(-1, 3)
        rgb_values = model_outputs['rgb_values'].reshape(-1, 3)

        has_grad = 'grad_theta' in model_outputs
        if has_grad:
            grad_theta = model_outputs['grad_theta'].reshape(-1, 3)
        else:
            grad_theta = jnp.array([[1.0, 0.0, 0.0]], f32)       # contributes exactly 0

        has_j = model_outputs['j3d_local'].shape[0] > 0
        if has_j:
            j3d_l = model_outputs['j3d_local']
            j3d_g = model_outputs['j3d_global']
            j2d_l = model_outputs['j2d_local']
            j2d_g = model_outputs['j2d_global']
            j2d_lc = model_outputs['j2d_local_calib']
            j2d_gc = model_outputs['j2d_global_calib']
        else:
            z3 = jnp.zeros((1, 3), f32)
            z2 = jnp.zeros((1, 2), f32)
            j3d_l = j3d_g = z3
            j2d_l = j2d_g = j2d_lc = j2d_gc = z2

        scal, costs = _volsdf_forward(
            lines2d, lines2d_gt, lines_weight, lines2d_calib,
            rgb_values, rgb_gt, grad_theta, model_outputs['K'],
            j3d_l, j3d_g, j2d_lc, j2d_gc, j2d_l, j2d_g)

        l2d_u = scal[0]
        line_c = scal[1]
        rgb_l = scal[2]
        eik_l = scal[3] if has_grad else jnp.asarray(0.0, f32)
        count = scal[4].astype(jnp.int32)

        loss = rgb_l + self.eikonal_weight * eik_l + self.line_weight * line_c

        output = {
            'loss': loss, 'rgb_loss': rgb_l, 'eikonal_loss': eik_l,
            'line_loss': line_c, 'l2d_loss': l2d_u, 'count': count,
            'j3d_loss': jnp.asarray(0.0, f32), 'j2d_loss': jnp.asarray(0.0, f32),
            'j2d_stat': jnp.asarray(0.0, f32), 'jcount': jnp.asarray(0, jnp.int32),
        }

        if has_j:
            jcost = costs[0]                                     # combined cost
            a0, a1 = _linear_sum_assignment(np.asarray(jax.device_get(jcost)))
            a0 = jnp.asarray(np.asarray(a0), jnp.int32)
            a1 = jnp.asarray(np.asarray(a1), jnp.int32)
            assign_cost = jcost[a0, a1]
            # post-assignment losses == means of matched cost-matrix entries
            j3d_loss = jnp.mean(costs[1][a0, a1])
            j2d_loss = jnp.mean(costs[2][a0, a1])
            j2d_stat = jnp.mean(costs[3][a0, a1])
            jcount = jnp.sum(assign_cost < 10.0).astype(jnp.int32)

            loss = loss + self.junction_3d_weight * j3d_loss \
                        + self.junction_2d_weight * j2d_loss
            output['loss'] = loss
            output['j3d_loss'] = j3d_loss
            output['j2d_loss'] = j2d_loss
            output['j2d_stat'] = j2d_stat
            output['jcount'] = jcount

        if 'median' in model_outputs:
            output['median'] = model_outputs['median']
        return output


# ----------------------------------------------------------------------------
if __name__ == "__main__":
    key = jax.random.PRNGKey(0)
    ks = jax.random.split(key, 13)
    N, M, J = 128, 96, 8   # lines/rays, eikonal points, junctions

    gt_coords = jax.random.uniform(ks[0], (N, 4), jnp.float32, 0.0, 128.0)
    gt_weight = jax.random.uniform(ks[1], (N, 1), jnp.float32, 0.0, 1.0)
    K = jnp.array([[200.0, 0.0, 64.0],
                   [0.0, 200.0, 64.0],
                   [0.0, 0.0, 1.0]], jnp.float32)

    # calibrated GT (for generating a sensible lines2d_calib prediction)
    pts = gt_coords.reshape(-1, 2)
    pts_h = jnp.concatenate([pts, jnp.ones_like(pts[:, :1])], axis=-1)
    pts_c = (jnp.linalg.inv(K) @ pts_h.T).T
    gt_calib = (pts_c[:, :2] / pts_c[:, 2:3]).reshape(-1, 4)

    model_outputs = {
        'lines2d': gt_coords + 0.5 * jax.random.normal(ks[2], (N, 4), jnp.float32),
        'lines2d_calib': gt_calib + 0.01 * jax.random.normal(ks[3], (N, 4), jnp.float32),
        'K': K,
        'rgb_values': jax.random.uniform(ks[4], (N, 3), jnp.float32),
        'grad_theta': jax.random.normal(ks[5], (M, 3), jnp.float32),
        'j3d_local': jax.random.normal(ks[6], (J, 3), jnp.float32),
        'j3d_global': jax.random.normal(ks[7], (J, 3), jnp.float32),
        'j2d_local': jax.random.uniform(ks[8], (J, 2), jnp.float32, 0.0, 128.0),
        'j2d_global': jax.random.uniform(ks[9], (J, 2), jnp.float32, 0.0, 128.0),
        'j2d_local_calib': jax.random.normal(ks[10], (J, 2), jnp.float32) * 0.1,
        'j2d_global_calib': jax.random.normal(ks[11], (J, 2), jnp.float32) * 0.1,
    }
    ground_truth = {
        'lines2d': jnp.concatenate([gt_coords, gt_weight], axis=-1)[None],   # (1, N, 5)
        'rgb': jax.random.uniform(ks[12], (1, N, 3), jnp.float32),
    }

    loss_fn = VolSDFLossPallas(rgb_loss='L1', eikonal_weight=0.1, line_weight=0.01)
    out = loss_fn(model_outputs, ground_truth)
    for v in out.values():
        jax.block_until_ready(v)
    print("KERNEL_OK")
</pallas_src>

<mosaic_0001>
module attributes {stable_mosaic.version = 11 : i64} {
  func.func @kernel(%arg0: i32, %arg1: i32, %arg2: memref<14x8x128xf32, #tpu.memory_space<vmem>>, %arg3: memref<6x8x128xf32, #tpu.memory_space<vmem>>, %arg4: memref<3x8x128xf32, #tpu.memory_space<vmem>>, %arg5: memref<8x8xf32, #tpu.memory_space<vmem>>, %arg6: memref<8x128xf32, #tpu.memory_space<vmem>>, %arg7: memref<3x3xf32, #tpu.memory_space<smem>>, %arg8: memref<1x8x128xf32, #tpu.memory_space<vmem>>, %arg9: memref<1x4x8x128xf32, #tpu.memory_space<vmem>>, %arg10: memref<8x128xf32, #tpu.memory_space<vmem>>, %arg11: memref<8x128xf32, #tpu.memory_space<vmem>>, %arg12: memref<8x128xf32, #tpu.memory_space<vmem>>, %arg13: memref<8x128xf32, #tpu.memory_space<vmem>>, %arg14: memref<8x128xf32, #tpu.memory_space<vmem>>, %arg15: memref<8x128xf32, #tpu.memory_space<vmem>>) attributes {dimension_semantics = [#tpu.dimension_semantics<parallel>, #tpu.dimension_semantics<arbitrary>], iteration_bounds = array<i64: 2, 1>, scalar_prefetch = 0 : i64, scratch_operands = 6 : i64, tpu.core_type = #tpu.core_type<tc>, window_params = [{transform_indices = @transform_0, window_bounds = array<i64: 14, 8, 128>}, {transform_indices = @transform_1, window_bounds = array<i64: 6, 8, 128>}, {transform_indices = @transform_2, window_bounds = array<i64: 3, 8, 128>}, {pipeline_mode = #tpu.pipeline_mode<synchronous>, transform_indices = @transform_3, window_bounds = array<i64: 8, 8>}, {pipeline_mode = #tpu.pipeline_mode<synchronous>, transform_indices = @transform_4, window_bounds = array<i64: 8, 128>}, {transform_indices = @transform_5, window_bounds = array<i64: 3, 3>}, {transform_indices = @transform_6, window_bounds = array<i64: 1, 8, 128>}, {transform_indices = @transform_7, window_bounds = array<i64: 1, 4, 8, 128>}]} {
    %c1_i32 = arith.constant 1 : i32
    %0 = arith.muli %arg0, %c1_i32 : i32
    %1 = arith.addi %0, %arg1 : i32
    %c0_i32 = arith.constant 0 : i32
    %2 = arith.cmpi eq, %arg1, %c0_i32 : i32
    %3 = arith.extui %2 : i1 to i32
    %c0_i32_0 = arith.constant 0 : i32
    %4 = arith.cmpi ne, %3, %c0_i32_0 : i32
    scf.if %4 {
      %cst = arith.constant 0.000000e+00 : f32
      %17 = vector.broadcast %cst : f32 to vector<8x128xf32>
      %c0 = arith.constant 0 : index
      %c0_9 = arith.constant 0 : index
      %18 = vector.load %arg10[%c0, %c0_9] : memref<8x128xf32, #tpu.memory_space<vmem>>, vector<8x128xf32>
      tpu.vector_store %arg10[%c0, %c0_9], %17 {strides = array<i32>} : memref<8x128xf32, #tpu.memory_space<vmem>>, vector<8x128xf32>,
      %cst_10 = arith.constant 0.000000e+00 : f32
      %19 = vector.broadcast %cst_10 : f32 to vector<8x128xf32>
      %c0_11 = arith.constant 0 : index
      %c0_12 = arith.constant 0 : index
      %20 = vector.load %arg11[%c0_11, %c0_12] : memref<8x128xf32, #tpu.memory_space<vmem>>, vector<8x128xf32>
      tpu.vector_store %arg11[%c0_11, %c0_12], %19 {strides = array<i32>} : memref<8x128xf32, #tpu.memory_space<vmem>>, vector<8x128xf32>,
      %cst_13 = arith.constant 0.000000e+00 : f32
      %21 = vector.broadcast %cst_13 : f32 to vector<8x128xf32>
      %c0_14 = arith.constant 0 : index
      %c0_15 = arith.constant 0 : index
      %22 = vector.load %arg12[%c0_14, %c0_15] : memref<8x128xf32, #tpu.memory_space<vmem>>, vector<8x128xf32>
      tpu.vector_store %arg12[%c0_14, %c0_15], %21 {strides = array<i32>} : memref<8x128xf32, #tpu.memory_space<vmem>>, vector<8x128xf32>,
      %cst_16 = arith.constant 0.000000e+00 : f32
      %23 = vector.broadcast %cst_16 : f32 to vector<8x128xf32>
      %c0_17 = arith.constant 0 : index
      %c0_18 = arith.constant 0 : index
      %24 = vector.load %arg13[%c0_17, %c0_18] : memref<8x128xf32, #tpu.memory_space<vmem>>, vector<8x128xf32>
      tpu.vector_store %arg13[%c0_17, %c0_18], %23 {strides = array<i32>} : memref<8x128xf32, #tpu.memory_space<vmem>>, vector<8x128xf32>,
      %cst_19 = arith.constant 0.000000e+00 : f32
      %25 = vector.broadcast %cst_19 : f32 to vector<8x128xf32>
      %c0_20 = arith.constant 0 : index
      %c0_21 = arith.constant 0 : index
      %26 = vector.load %arg14[%c0_20, %c0_21] : memref<8x128xf32, #tpu.memory_space<vmem>>, vector<8x128xf32>
      tpu.vector_store %arg14[%c0_20, %c0_21], %25 {strides = array<i32>} : memref<8x128xf32, #tpu.memory_space<vmem>>, vector<8x128xf32>,
      %cst_22 = arith.constant 0.000000e+00 : f32
      %27 = vector.broadcast %cst_22 : f32 to vector<8x128xf32>
      %c0_23 = arith.constant 0 : index
      %c0_24 = arith.constant 0 : index
      %28 = vector.load %arg15[%c0_23, %c0_24] : memref<8x128xf32, #tpu.memory_space<vmem>>, vector<8x128xf32>
      tpu.vector_store %arg15[%c0_23, %c0_24], %27 {strides = array<i32>} : memref<8x128xf32, #tpu.memory_space<vmem>>, vector<8x128xf32>,
      %c0_25 = arith.constant 0 : index
      %c0_26 = arith.constant 0 : index
      %29 = vector.load %arg5[%c0_25, %c0_26] : memref<8x8xf32, #tpu.memory_space<vmem>>, vector<8x8xf32>
      %c0_27 = arith.constant 0 : index
      %c0_28 = arith.constant 0 : index
      %30 = vector.load %arg6[%c0_27, %c0_28] : memref<8x128xf32, #tpu.memory_space<vmem>>, vector<8x128xf32>
      %31 = vector.extract_strided_slice %29 {offsets = [0, 0], sizes = [8, 1], strides = [1, 1]} : vector<8x8xf32> to vector<8x1xf32>
      %32 = vector.extract_strided_slice %30 {offsets = [0, 0], sizes = [1, 128], strides = [1, 1]} : vector<8x128xf32> to vector<1x128xf32>
      %33 = vector.broadcast %31 : vector<8x1xf32> to vector<8x128xf32>
      %34 = vector.broadcast %32 : vector<1x128xf32> to vector<8x128xf32>
      %35 = arith.subf %33, %34 : vector<8x128xf32>
      %36 = math.absf %35 : vector<8x128xf32>
      %37 = vector.extract_strided_slice %29 {offsets = [0, 1], sizes = [8, 1], strides = [1, 1]} : vector<8x8xf32> to vector<8x1xf32>
      %38 = vector.extract_strided_slice %30 {offsets = [1, 0], sizes = [1, 128], strides = [1, 1]} : vector<8x128xf32> to vector<1x128xf32>
      %39 = vector.broadcast %37 : vector<8x1xf32> to vector<8x128xf32>
      %40 = vector.broadcast %38 : vector<1x128xf32> to vector<8x128xf32>
      %41 = arith.subf %39, %40 : vector<8x128xf32>
      %42 = math.absf %41 : vector<8x128xf32>
      %43 = arith.addf %36, %42 : vector<8x128xf32>
      %44 = vector.extract_strided_slice %29 {offsets = [0, 2], sizes = [8, 1], strides = [1, 1]} : vector<8x8xf32> to vector<8x1xf32>
      %45 = vector.extract_strided_slice %30 {offsets = [2, 0], sizes = [1, 128], strides = [1, 1]} : vector<8x128xf32> to vector<1x128xf32>
      %46 = vector.broadcast %44 : vector<8x1xf32> to vector<8x128xf32>
      %47 = vector.broadcast %45 : vector<1x128xf32> to vector<8x128xf32>
      %48 = arith.subf %46, %47 : vector<8x128xf32>
      %49 = math.absf %48 : vector<8x128xf32>
      %50 = arith.addf %43, %49 : vector<8x128xf32>
      %51 = vector.extract_strided_slice %29 {offsets = [0, 3], sizes = [8, 1], strides = [1, 1]} : vector<8x8xf32> to vector<8x1xf32>
      %52 = vector.extract_strided_slice %30 {offsets = [3, 0], sizes = [1, 128], strides = [1, 1]} : vector<8x128xf32> to vector<1x128xf32>
      %53 = vector.broadcast %51 : vector<8x1xf32> to vector<8x128xf32>
      %54 = vector.broadcast %52 : vector<1x128xf32> to vector<8x128xf32>
      %55 = arith.subf %53, %54 : vector<8x128xf32>
      %56 = math.absf %55 : vector<8x128xf32>
      %57 = vector.extract_strided_slice %29 {offsets = [0, 4], sizes = [8, 1], strides = [1, 1]} : vector<8x8xf32> to vector<8x1xf32>
      %58 = vector.extract_strided_slice %30 {offsets = [4, 0], sizes = [1, 128], strides = [1, 1]} : vector<8x128xf32> to vector<1x128xf32>
      %59 = vector.broadcast %57 : vector<8x1xf32> to vector<8x128xf32>
      %60 = vector.broadcast %58 : vector<1x128xf32> to vector<8x128xf32>
      %61 = arith.subf %59, %60 : vector<8x128xf32>
      %62 = math.absf %61 : vector<8x128xf32>
      %63 = arith.addf %56, %62 : vector<8x128xf32>
      %64 = vector.extract_strided_slice %29 {offsets = [0, 5], sizes = [8, 1], strides = [1, 1]} : vector<8x8xf32> to vector<8x1xf32>
      %65 = vector.extract_strided_slice %30 {offsets = [5, 0], sizes = [1, 128], strides = [1, 1]} : vector<8x128xf32> to vector<1x128xf32>
      %66 = vector.broadcast %64 : vector<8x1xf32> to vector<8x128xf32>
      %67 = vector.broadcast %65 : vector<1x128xf32> to vector<8x128xf32>
      %68 = arith.subf %66, %67 : vector<8x128xf32>
      %69 = math.absf %68 : vector<8x128xf32>
      %70 = vector.extract_strided_slice %29 {offsets = [0, 6], sizes = [8, 1], strides = [1, 1]} : vector<8x8xf32> to vector<8x1xf32>
      %71 = vector.extract_strided_slice %30 {offsets = [6, 0], sizes = [1, 128], strides = [1, 1]} : vector<8x128xf32> to vector<1x128xf32>
      %72 = vector.broadcast %70 : vector<8x1xf32> to vector<8x128xf32>
      %73 = vector.broadcast %71 : vector<1x128xf32> to vector<8x128xf32>
      %74 = arith.subf %72, %73 : vector<8x128xf32>
      %75 = math.absf %74 : vector<8x128xf32>
      %76 = arith.addf %69, %75 : vector<8x128xf32>
      %cst_29 = arith.constant 1.000000e-01 : f32
      %77 = vector.broadcast %cst_29 : f32 to vector<8x128xf32>
      %78 = arith.mulf %77, %63 : vector<8x128xf32>
      %79 = arith.addf %50, %78 : vector<8x128xf32>
      %c0_30 = arith.constant 0 : index
      %c0_31 = arith.constant 0 : index
      %c0_32 = arith.constant 0 : index
      %c0_33 = arith.constant 0 : index
      %80 = vector.load %arg9[%c0_30, %c0_31, %c0_32, %c0_33] : memref<1x4x8x128xf32, #tpu.memory_space<vmem>>, vector<1x1x8x128xf32>
      %81 = vector.shape_cast %80 : vector<1x1x8x128xf32> to vector<8x128xf32>
      %82 = vector.shape_cast %79 : vector<8x128xf32> to vector<1x1x8x128xf32>
      tpu.vector_store %arg9[%c0_30, %c0_31, %c0_32, %c0_33], %82 {strides = array<i32>} : memref<1x4x8x128xf32, #tpu.memory_space<vmem>>, vector<1x1x8x128xf32>,
      %c0_34 = arith.constant 0 : index
      %c1 = arith.constant 1 : index
      %c0_35 = arith.constant 0 : index
      %c0_36 = arith.constant 0 : index
      %83 = vector.load %arg9[%c0_34, %c1, %c0_35, %c0_36] : memref<1x4x8x128xf32, #tpu.memory_space<vmem>>, vector<1x1x8x128xf32>
      %84 = vector.shape_cast %83 : vector<1x1x8x128xf32> to vector<8x128xf32>
      %85 = vector.shape_cast %50 : vector<8x128xf32> to vector<1x1x8x128xf32>
      tpu.vector_store %arg9[%c0_34, %c1, %c0_35, %c0_36], %85 {strides = array<i32>} : memref<1x4x8x128xf32, #tpu.memory_space<vmem>>, vector<1x1x8x128xf32>,
      %c0_37 = arith.constant 0 : index
      %c2 = arith.constant 2 : index
      %c0_38 = arith.constant 0 : index
      %c0_39 = arith.constant 0 : index
      %86 = vector.load %arg9[%c0_37, %c2, %c0_38, %c0_39] : memref<1x4x8x128xf32, #tpu.memory_space<vmem>>, vector<1x1x8x128xf32>
      %87 = vector.shape_cast %86 : vector<1x1x8x128xf32> to vector<8x128xf32>
      %88 = vector.shape_cast %63 : vector<8x128xf32> to vector<1x1x8x128xf32>
      tpu.vector_store %arg9[%c0_37, %c2, %c0_38, %c0_39], %88 {strides = array<i32>} : memref<1x4x8x128xf32, #tpu.memory_space<vmem>>, vector<1x1x8x128xf32>,
      %c0_40 = arith.constant 0 : index
      %c3 = arith.constant 3 : index
      %c0_41 = arith.constant 0 : index
      %c0_42 = arith.constant 0 : index
      %89 = vector.load %arg9[%c0_40, %c3, %c0_41, %c0_42] : memref<1x4x8x128xf32, #tpu.memory_space<vmem>>, vector<1x1x8x128xf32>
      %90 = vector.shape_cast %89 : vector<1x1x8x128xf32> to vector<8x128xf32>
      %91 = vector.shape_cast %76 : vector<8x128xf32> to vector<1x1x8x128xf32>
      tpu.vector_store %arg9[%c0_40, %c3, %c0_41, %c0_42], %91 {strides = array<i32>} : memref<1x4x8x128xf32, #tpu.memory_space<vmem>>, vector<1x1x8x128xf32>,
    } else {
    }
    %c1_i32_1 = arith.constant 1 : i32
    %5 = arith.cmpi slt, %1, %c1_i32_1 : i32
    %6 = arith.extui %5 : i1 to i32
    %c0_i32_2 = arith.constant 0 : i32
    %7 = arith.cmpi ne, %6, %c0_i32_2 : i32
    scf.if %7 {
      %c0 = arith.constant 0 : index
      %c0_9 = arith.constant 0 : index
      %c0_10 = arith.constant 0 : index
      %17 = vector.load %arg2[%c0, %c0_9, %c0_10] : memref<14x8x128xf32, #tpu.memory_space<vmem>>, vector<1x8x128xf32>
      %18 = vector.shape_cast %17 : vector<1x8x128xf32> to vector<8x128xf32>
      %c1 = arith.constant 1 : index
      %c0_11 = arith.constant 0 : index
      %c0_12 = arith.constant 0 : index
      %19 = vector.load %arg2[%c1, %c0_11, %c0_12] : memref<14x8x128xf32, #tpu.memory_space<vmem>>, vector<1x8x128xf32>
      %20 = vector.shape_cast %19 : vector<1x8x128xf32> to vector<8x128xf32>
      %c2 = arith.constant 2 : index
      %c0_13 = arith.constant 0 : index
      %c0_14 = arith.constant 0 : index
      %21 = vector.load %arg2[%c2, %c0_13, %c0_14] : memref<14x8x128xf32, #tpu.memory_space<vmem>>, vector<1x8x128xf32>
      %22 = vector.shape_cast %21 : vector<1x8x128xf32> to vector<8x128xf32>
      %c3 = arith.constant 3 : index
      %c0_15 = arith.constant 0 : index
      %c0_16 = arith.constant 0 : index
      %23 = vector.load %arg2[%c3, %c0_15, %c0_16] : memref<14x8x128xf32, #tpu.memory_space<vmem>>, vector<1x8x128xf32>
      %24 = vector.shape_cast %23 : vector<1x8x128xf32> to vector<8x128xf32>
      %c4 = arith.constant 4 : index
      %c0_17 = arith.constant 0 : index
      %c0_18 = arith.constant 0 : index
      %25 = vector.load %arg2[%c4, %c0_17, %c0_18] : memref<14x8x128xf32, #tpu.memory_space<vmem>>, vector<1x8x128xf32>
      %26 = vector.shape_cast %25 : vector<1x8x128xf32> to vector<8x128xf32>
      %c5 = arith.constant 5 : index
      %c0_19 = arith.constant 0 : index
      %c0_20 = arith.constant 0 : index
      %27 = vector.load %arg2[%c5, %c0_19, %c0_20] : memref<14x8x128xf32, #tpu.memory_space<vmem>>, vector<1x8x128xf32>
      %28 = vector.shape_cast %27 : vector<1x8x128xf32> to vector<8x128xf32>
      %c6 = arith.constant 6 : index
      %c0_21 = arith.constant 0 : index
      %c0_22 = arith.constant 0 : index
      %29 = vector.load %arg2[%c6, %c0_21, %c0_22] : memref<14x8x128xf32, #tpu.memory_space<vmem>>, vector<1x8x128xf32>
      %30 = vector.shape_cast %29 : vector<1x8x128xf32> to vector<8x128xf32>
      %c7 = arith.constant 7 : index
      %c0_23 = arith.constant 0 : index
      %c0_24 = arith.constant 0 : index
      %31 = vector.load %arg2[%c7, %c0_23, %c0_24] : memref<14x8x128xf32, #tpu.memory_space<vmem>>, vector<1x8x128xf32>
      %32 = vector.shape_cast %31 : vector<1x8x128xf32> to vector<8x128xf32>
      %c8 = arith.constant 8 : index
      %c0_25 = arith.constant 0 : index
      %c0_26 = arith.constant 0 : index
      %33 = vector.load %arg2[%c8, %c0_25, %c0_26] : memref<14x8x128xf32, #tpu.memory_space<vmem>>, vector<1x8x128xf32>
      %34 = vector.shape_cast %33 : vector<1x8x128xf32> to vector<8x128xf32>
      %c9 = arith.constant 9 : index
      %c0_27 = arith.constant 0 : index
      %c0_28 = arith.constant 0 : index
      %35 = vector.load %arg2[%c9, %c0_27, %c0_28] : memref<14x8x128xf32, #tpu.memory_space<vmem>>, vector<1x8x128xf32>
      %36 = vector.shape_cast %35 : vector<1x8x128xf32> to vector<8x128xf32>
      %c10 = arith.constant 10 : index
      %c0_29 = arith.constant 0 : index
      %c0_30 = arith.constant 0 : index
      %37 = vector.load %arg2[%c10, %c0_29, %c0_30] : memref<14x8x128xf32, #tpu.memory_space<vmem>>, vector<1x8x128xf32>
      %38 = vector.shape_cast %37 : vector<1x8x128xf32> to vector<8x128xf32>
      %c11 = arith.constant 11 : index
      %c0_31 = arith.constant 0 : index
      %c0_32 = arith.constant 0 : index
      %39 = vector.load %arg2[%c11, %c0_31, %c0_32] : memref<14x8x128xf32, #tpu.memory_space<vmem>>, vector<1x8x128xf32>
      %40 = vector.shape_cast %39 : vector<1x8x128xf32> to vector<8x128xf32>
      %c12 = arith.constant 12 : index
      %c0_33 = arith.constant 0 : index
      %c0_34 = arith.constant 0 : index
      %41 = vector.load %arg2[%c12, %c0_33, %c0_34] : memref<14x8x128xf32, #tpu.memory_space<vmem>>, vector<1x8x128xf32>
      %42 = vector.shape_cast %41 : vector<1x8x128xf32> to vector<8x128xf32>
      %c13 = arith.constant 13 : index
      %c0_35 = arith.constant 0 : index
      %c0_36 = arith.constant 0 : index
      %43 = vector.load %arg2[%c13, %c0_35, %c0_36] : memref<14x8x128xf32, #tpu.memory_space<vmem>>, vector<1x8x128xf32>
      %44 = vector.shape_cast %43 : vector<1x8x128xf32> to vector<8x128xf32>
      %45 = arith.subf %18, %26 : vector<8x128xf32>
      %46 = arith.subf %20, %28 : vector<8x128xf32>
      %47 = arith.subf %22, %30 : vector<8x128xf32>
      %48 = arith.subf %24, %32 : vector<8x128xf32>
      %49 = arith.subf %18, %30 : vector<8x128xf32>
      %50 = arith.subf %20, %32 : vector<8x128xf32>
      %51 = arith.subf %22, %26 : vector<8x128xf32>
      %52 = arith.subf %24, %28 : vector<8x128xf32>
      %53 = arith.mulf %45, %45 : vector<8x128xf32>
      %54 = arith.mulf %46, %46 : vector<8x128xf32>
      %55 = arith.addf %53, %54 : vector<8x128xf32>
      %56 = arith.mulf %47, %47 : vector<8x128xf32>
      %57 = arith.addf %55, %56 : vector<8x128xf32>
      %58 = arith.mulf %48, %48 : vector<8x128xf32>
      %59 = arith.addf %57, %58 : vector<8x128xf32>
      %60 = arith.mulf %49, %49 : vector<8x128xf32>
      %61 = arith.mulf %50, %50 : vector<8x128xf32>
      %62 = arith.addf %60, %61 : vector<8x128xf32>
      %63 = arith.mulf %51, %51 : vector<8x128xf32>
      %64 = arith.addf %62, %63 : vector<8x128xf32>
      %65 = arith.mulf %52, %52 : vector<8x128xf32>
      %66 = arith.addf %64, %65 : vector<8x128xf32>
      %67 = math.absf %45 : vector<8x128xf32>
      %68 = math.absf %46 : vector<8x128xf32>
      %69 = arith.addf %67, %68 : vector<8x128xf32>
      %70 = math.absf %47 : vector<8x128xf32>
      %71 = arith.addf %69, %70 : vector<8x128xf32>
      %72 = math.absf %48 : vector<8x128xf32>
      %73 = arith.addf %71, %72 : vector<8x128xf32>
      %cst = arith.constant 2.500000e-01 : f32
      %74 = vector.broadcast %cst : f32 to vector<8x128xf32>
      %75 = arith.mulf %74, %73 : vector<8x128xf32>
      %76 = math.absf %49 : vector<8x128xf32>
      %77 = math.absf %50 : vector<8x128xf32>
      %78 = arith.addf %76, %77 : vector<8x128xf32>
      %79 = math.absf %51 : vector<8x128xf32>
      %80 = arith.addf %78, %79 : vector<8x128xf32>
      %81 = math.absf %52 : vector<8x128xf32>
      %82 = arith.addf %80, %81 : vector<8x128xf32>
      %cst_37 = arith.constant 2.500000e-01 : f32
      %83 = vector.broadcast %cst_37 : f32 to vector<8x128xf32>
      %84 = arith.mulf %83, %82 : vector<8x128xf32>
      %85 = arith.cmpf olt, %59, %66 : vector<8x128xf32>
      %86 = arith.select %85, %75, %84 : vector<8x128xi1>, vector<8x128xf32>
      %cst_38 = arith.constant 1.000000e+02 : f32
      %87 = vector.broadcast %cst_38 : f32 to vector<8x128xf32>
      %88 = arith.cmpf olt, %86, %87 : vector<8x128xf32>
      %cst_39 = arith.constant 0.000000e+00 : f32
      %89 = vector.broadcast %cst_39 : f32 to vector<8x128xf32>
      %90 = arith.select %88, %44, %89 : vector<8x128xi1>, vector<8x128xf32>
      %91 = arith.mulf %42, %90 : vector<8x128xf32>
      %c0_40 = arith.constant 0 : index
      %c0_41 = arith.constant 0 : index
      %92 = memref.load %arg7[%c0_40, %c0_41] : memref<3x3xf32, #tpu.memory_space<smem>>
      %c0_42 = arith.constant 0 : index
      %c1_43 = arith.constant 1 : index
      %93 = memref.load %arg7[%c0_42, %c1_43] : memref<3x3xf32, #tpu.memory_space<smem>>
      %c0_44 = arith.constant 0 : index
      %c2_45 = arith.constant 2 : index
      %94 = memref.load %arg7[%c0_44, %c2_45] : memref<3x3xf32, #tpu.memory_space<smem>>
      %c1_46 = arith.constant 1 : index
      %c0_47 = arith.constant 0 : index
      %95 = memref.load %arg7[%c1_46, %c0_47] : memref<3x3xf32, #tpu.memory_space<smem>>
      %c1_48 = arith.constant 1 : index
      %c1_49 = arith.constant 1 : index
      %96 = memref.load %arg7[%c1_48, %c1_49] : memref<3x3xf32, #tpu.memory_space<smem>>
      %c1_50 = arith.constant 1 : index
      %c2_51 = arith.constant 2 : index
      %97 = memref.load %arg7[%c1_50, %c2_51] : memref<3x3xf32, #tpu.memory_space<smem>>
      %c2_52 = arith.constant 2 : index
      %c0_53 = arith.constant 0 : index
      %98 = memref.load %arg7[%c2_52, %c0_53] : memref<3x3xf32, #tpu.memory_space<smem>>
      %c2_54 = arith.constant 2 : index
      %c1_55 = arith.constant 1 : index
      %99 = memref.load %arg7[%c2_54, %c1_55] : memref<3x3xf32, #tpu.memory_space<smem>>
      %c2_56 = arith.constant 2 : index
      %c2_57 = arith.constant 2 : index
      %100 = memref.load %arg7[%c2_56, %c2_57] : memref<3x3xf32, #tpu.memory_space<smem>>
      %101 = vector.broadcast %98 : f32 to vector<8x128xf32>
      %102 = arith.mulf %101, %26 : vector<8x128xf32>
      %103 = vector.broadcast %99 : f32 to vector<8x128xf32>
      %104 = arith.mulf %103, %28 : vector<8x128xf32>
      %105 = arith.addf %102, %104 : vector<8x128xf32>
      %106 = vector.broadcast %100 : f32 to vector<8x128xf32>
      %107 = arith.addf %105, %106 : vector<8x128xf32>
      %108 = tpu.reciprocal %107 : vector<8x128xf32> -> vector<8x128xf32>
      %109 = vector.broadcast %92 : f32 to vector<8x128xf32>
      %110 = arith.mulf %109, %26 : vector<8x128xf32>
      %111 = vector.broadcast %93 : f32 to vector<8x128xf32>
      %112 = arith.mulf %111, %28 : vector<8x128xf32>
      %113 = arith.addf %110, %112 : vector<8x128xf32>
      %114 = vector.broadcast %94 : f32 to vector<8x128xf32>
      %115 = arith.addf %113, %114 : vector<8x128xf32>
      %116 = arith.mulf %115, %108 : vector<8x128xf32>
      %117 = vector.broadcast %95 : f32 to vector<8x128xf32>
      %118 = arith.mulf %117, %26 : vector<8x128xf32>
      %119 = vector.broadcast %96 : f32 to vector<8x128xf32>
      %120 = arith.mulf %119, %28 : vector<8x128xf32>
      %121 = arith.addf %118, %120 : vector<8x128xf32>
      %122 = vector.broadcast %97 : f32 to vector<8x128xf32>
      %123 = arith.addf %121, %122 : vector<8x128xf32>
      %124 = arith.mulf %123, %108 : vector<8x128xf32>
      %125 = vector.broadcast %98 : f32 to vector<8x128xf32>
      %126 = arith.mulf %125, %30 : vector<8x128xf32>
      %127 = vector.broadcast %99 : f32 to vector<8x128xf32>
      %128 = arith.mulf %127, %32 : vector<8x128xf32>
      %129 = arith.addf %126, %128 : vector<8x128xf32>
      %130 = vector.broadcast %100 : f32 to vector<8x128xf32>
      %131 = arith.addf %129, %130 : vector<8x128xf32>
      %132 = tpu.reciprocal %131 : vector<8x128xf32> -> vector<8x128xf32>
      %133 = vector.broadcast %92 : f32 to vector<8x128xf32>
      %134 = arith.mulf %133, %30 : vector<8x128xf32>
      %135 = vector.broadcast %93 : f32 to vector<8x128xf32>
      %136 = arith.mulf %135, %32 : vector<8x128xf32>
      %137 = arith.addf %134, %136 : vector<8x128xf32>
      %138 = vector.broadcast %94 : f32 to vector<8x128xf32>
      %139 = arith.addf %137, %138 : vector<8x128xf32>
      %140 = arith.mulf %139, %132 : vector<8x128xf32>
      %141 = vector.broadcast %95 : f32 to vector<8x128xf32>
      %142 = arith.mulf %141, %30 : vector<8x128xf32>
      %143 = vector.broadcast %96 : f32 to vector<8x128xf32>
      %144 = arith.mulf %143, %32 : vector<8x128xf32>
      %145 = arith.addf %142, %144 : vector<8x128xf32>
      %146 = vector.broadcast %97 : f32 to vector<8x128xf32>
      %147 = arith.addf %145, %146 : vector<8x128xf32>
      %148 = arith.mulf %147, %132 : vector<8x128xf32>
      %149 = arith.subf %34, %116 : vector<8x128xf32>
      %150 = arith.subf %36, %124 : vector<8x128xf32>
      %151 = arith.subf %38, %140 : vector<8x128xf32>
      %152 = arith.subf %40, %148 : vector<8x128xf32>
      %153 = arith.subf %34, %140 : vector<8x128xf32>
      %154 = arith.subf %36, %148 : vector<8x128xf32>
      %155 = arith.subf %38, %116 : vector<8x128xf32>
      %156 = arith.subf %40, %124 : vector<8x128xf32>
      %157 = arith.mulf %149, %149 : vector<8x128xf32>
      %158 = arith.mulf %150, %150 : vector<8x128xf32>
      %159 = arith.addf %157, %158 : vector<8x128xf32>
      %160 = arith.mulf %151, %151 : vector<8x128xf32>
      %161 = arith.addf %159, %160 : vector<8x128xf32>
      %162 = arith.mulf %152, %152 : vector<8x128xf32>
      %163 = arith.addf %161, %162 : vector<8x128xf32>
      %164 = arith.mulf %153, %153 : vector<8x128xf32>
      %165 = arith.mulf %154, %154 : vector<8x128xf32>
      %166 = arith.addf %164, %165 : vector<8x128xf32>
      %167 = arith.mulf %155, %155 : vector<8x128xf32>
      %168 = arith.addf %166, %167 : vector<8x128xf32>
      %169 = arith.mulf %156, %156 : vector<8x128xf32>
      %170 = arith.addf %168, %169 : vector<8x128xf32>
      %171 = math.absf %149 : vector<8x128xf32>
      %172 = math.absf %150 : vector<8x128xf32>
      %173 = arith.addf %171, %172 : vector<8x128xf32>
      %174 = math.absf %151 : vector<8x128xf32>
      %175 = arith.addf %173, %174 : vector<8x128xf32>
      %176 = math.absf %152 : vector<8x128xf32>
      %177 = arith.addf %175, %176 : vector<8x128xf32>
      %cst_58 = arith.constant 2.500000e-01 : f32
      %178 = vector.broadcast %cst_58 : f32 to vector<8x128xf32>
      %179 = arith.mulf %178, %177 : vector<8x128xf32>
      %180 = math.absf %153 : vector<8x128xf32>
      %181 = math.absf %154 : vector<8x128xf32>
      %182 = arith.addf %180, %181 : vector<8x128xf32>
      %183 = math.absf %155 : vector<8x128xf32>
      %184 = arith.addf %182, %183 : vector<8x128xf32>
      %185 = math.absf %156 : vector<8x128xf32>
      %186 = arith.addf %184, %185 : vector<8x128xf32>
      %cst_59 = arith.constant 2.500000e-01 : f32
      %187 = vector.broadcast %cst_59 : f32 to vector<8x128xf32>
      %188 = arith.mulf %187, %186 : vector<8x128xf32>
      %189 = arith.cmpf olt, %163, %170 : vector<8x128xf32>
      %190 = arith.select %189, %179, %188 : vector<8x128xi1>, vector<8x128xf32>
      %cst_60 = arith.constant 0.000000e+00 : f32
      %191 = vector.broadcast %cst_60 : f32 to vector<8x128xf32>
      %192 = arith.cmpf ogt, %44, %191 : vector<8x128xf32>
      %cst_61 = arith.constant 0.000000e+00 : f32
      %193 = vector.broadcast %cst_61 : f32 to vector<8x128xf32>
      %194 = arith.select %192, %190, %193 : vector<8x128xi1>, vector<8x128xf32>
      %cst_62 = arith.constant 1.000000e+02 : f32
      %195 = vector.broadcast %cst_62 : f32 to vector<8x128xf32>
      %196 = arith.cmpf olt, %194, %195 : vector<8x128xf32>
      %cst_63 = arith.constant 0.000000e+00 : f32
      %197 = vector.broadcast %cst_63 : f32 to vector<8x128xf32>
      %198 = arith.select %196, %44, %197 : vector<8x128xi1>, vector<8x128xf32>
      %c0_64 = arith.constant 0 : index
      %c0_65 = arith.constant 0 : index
      %199 = vector.load %arg10[%c0_64, %c0_65] : memref<8x128xf32, #tpu.memory_space<vmem>>, vector<8x128xf32>
      %200 = arith.mulf %86, %91 : vector<8x128xf32>
      %201 = arith.addf %199, %200 : vector<8x128xf32>
      %c0_66 = arith.constant 0 : index
      %c0_67 = arith.constant 0 : index
      %202 = vector.load %arg10[%c0_66, %c0_67] : memref<8x128xf32, #tpu.memory_space<vmem>>, vector<8x128xf32>
      tpu.vector_store %arg10[%c0_66, %c0_67], %201 {strides = array<i32>} : memref<8x128xf32, #tpu.memory_space<vmem>>, vector<8x128xf32>,
      %c0_68 = arith.constant 0 : index
      %c0_69 = arith.constant 0 : index
      %203 = vector.load %arg11[%c0_68, %c0_69] : memref<8x128xf32, #tpu.memory_space<vmem>>, vector<8x128xf32>
      %204 = arith.addf %203, %90 : vector<8x128xf32>
      %c0_70 = arith.constant 0 : index
      %c0_71 = arith.constant 0 : index
      %205 = vector.load %arg11[%c0_70, %c0_71] : memref<8x128xf32, #tpu.memory_space<vmem>>, vector<8x128xf32>
      tpu.vector_store %arg11[%c0_70, %c0_71], %204 {strides = array<i32>} : memref<8x128xf32, #tpu.memory_space<vmem>>, vector<8x128xf32>,
      %c0_72 = arith.constant 0 : index
      %c0_73 = arith.constant 0 : index
      %206 = vector.load %arg12[%c0_72, %c0_73] : memref<8x128xf32, #tpu.memory_space<vmem>>, vector<8x128xf32>
      %207 = arith.mulf %194, %91 : vector<8x128xf32>
      %208 = arith.mulf %207, %198 : vector<8x128xf32>
      %209 = arith.addf %206, %208 : vector<8x128xf32>
      %c0_74 = arith.constant 0 : index
      %c0_75 = arith.constant 0 : index
      %210 = vector.load %arg12[%c0_74, %c0_75] : memref<8x128xf32, #tpu.memory_space<vmem>>, vector<8x128xf32>
      tpu.vector_store %arg12[%c0_74, %c0_75], %209 {strides = array<i32>} : memref<8x128xf32, #tpu.memory_space<vmem>>, vector<8x128xf32>,
      %c0_76 = arith.constant 0 : index
      %c0_77 = arith.constant 0 : index
      %211 = vector.load %arg13[%c0_76, %c0_77] : memref<8x128xf32, #tpu.memory_space<vmem>>, vector<8x128xf32>
      %212 = arith.addf %211, %198 : vector<8x128xf32>
      %c0_78 = arith.constant 0 : index
      %c0_79 = arith.constant 0 : index
      %213 = vector.load %arg13[%c0_78, %c0_79] : memref<8x128xf32, #tpu.memory_space<vmem>>, vector<8x128xf32>
      tpu.vector_store %arg13[%c0_78, %c0_79], %212 {strides = array<i32>} : memref<8x128xf32, #tpu.memory_space<vmem>>, vector<8x128xf32>,
    } else {
    }
    %c1_i32_3 = arith.constant 1 : i32
    %8 = arith.cmpi slt, %1, %c1_i32_3 : i32
    %9 = arith.extui %8 : i1 to i32
    %c0_i32_4 = arith.constant 0 : i32
    %10 = arith.cmpi ne, %9, %c0_i32_4 : i32
    scf.if %10 {
      %c0 = arith.constant 0 : index
      %c0_9 = arith.constant 0 : index
      %17 = vector.load %arg14[%c0, %c0_9] : memref<8x128xf32, #tpu.memory_space<vmem>>, vector<8x128xf32>
      %c0_10 = arith.constant 0 : index
      %c0_11 = arith.constant 0 : index
      %c0_12 = arith.constant 0 : index
      %18 = vector.load %arg3[%c0_10, %c0_11, %c0_12] : memref<6x8x128xf32, #tpu.memory_space<vmem>>, vector<1x8x128xf32>
      %19 = vector.shape_cast %18 : vector<1x8x128xf32> to vector<8x128xf32>
      %c3 = arith.constant 3 : index
      %c0_13 = arith.constant 0 : index
      %c0_14 = arith.constant 0 : index
      %20 = vector.load %arg3[%c3, %c0_13, %c0_14] : memref<6x8x128xf32, #tpu.memory_space<vmem>>, vector<1x8x128xf32>
      %21 = vector.shape_cast %20 : vector<1x8x128xf32> to vector<8x128xf32>
      %22 = arith.subf %19, %21 : vector<8x128xf32>
      %23 = math.absf %22 : vector<8x128xf32>
      %c1 = arith.constant 1 : index
      %c0_15 = arith.constant 0 : index
      %c0_16 = arith.constant 0 : index
      %24 = vector.load %arg3[%c1, %c0_15, %c0_16] : memref<6x8x128xf32, #tpu.memory_space<vmem>>, vector<1x8x128xf32>
      %25 = vector.shape_cast %24 : vector<1x8x128xf32> to vector<8x128xf32>
      %c4 = arith.constant 4 : index
      %c0_17 = arith.constant 0 : index
      %c0_18 = arith.constant 0 : index
      %26 = vector.load %arg3[%c4, %c0_17, %c0_18] : memref<6x8x128xf32, #tpu.memory_space<vmem>>, vector<1x8x128xf32>
      %27 = vector.shape_cast %26 : vector<1x8x128xf32> to vector<8x128xf32>
      %28 = arith.subf %25, %27 : vector<8x128xf32>
      %29 = math.absf %28 : vector<8x128xf32>
      %30 = arith.addf %23, %29 : vector<8x128xf32>
      %c2 = arith.constant 2 : index
      %c0_19 = arith.constant 0 : index
      %c0_20 = arith.constant 0 : index
      %31 = vector.load %arg3[%c2, %c0_19, %c0_20] : memref<6x8x128xf32, #tpu.memory_space<vmem>>, vector<1x8x128xf32>
      %32 = vector.shape_cast %31 : vector<1x8x128xf32> to vector<8x128xf32>
      %c5 = arith.constant 5 : index
      %c0_21 = arith.constant 0 : index
      %c0_22 = arith.constant 0 : index
      %33 = vector.load %arg3[%c5, %c0_21, %c0_22] : memref<6x8x128xf32, #tpu.memory_space<vmem>>, vector<1x8x128xf32>
      %34 = vector.shape_cast %33 : vector<1x8x128xf32> to vector<8x128xf32>
      %35 = arith.subf %32, %34 : vector<8x128xf32>
      %36 = math.absf %35 : vector<8x128xf32>
      %37 = arith.addf %30, %36 : vector<8x128xf32>
      %38 = arith.addf %17, %37 : vector<8x128xf32>
      %c0_23 = arith.constant 0 : index
      %c0_24 = arith.constant 0 : index
      %39 = vector.load %arg14[%c0_23, %c0_24] : memref<8x128xf32, #tpu.memory_space<vmem>>, vector<8x128xf32>
      tpu.vector_store %arg14[%c0_23, %c0_24], %38 {strides = array<i32>} : memref<8x128xf32, #tpu.memory_space<vmem>>, vector<8x128xf32>,
    } else {
    }
    %c1_i32_5 = arith.constant 1 : i32
    %11 = arith.cmpi slt, %1, %c1_i32_5 : i32
    %12 = arith.extui %11 : i1 to i32
    %c0_i32_6 = arith.constant 0 : i32
    %13 = arith.cmpi ne, %12, %c0_i32_6 : i32
    scf.if %13 {
      %c0 = arith.constant 0 : index
      %c0_9 = arith.constant 0 : index
      %c0_10 = arith.constant 0 : index
      %17 = vector.load %arg4[%c0, %c0_9, %c0_10] : memref<3x8x128xf32, #tpu.memory_space<vmem>>, vector<1x8x128xf32>
      %18 = vector.shape_cast %17 : vector<1x8x128xf32> to vector<8x128xf32>
      %c1 = arith.constant 1 : index
      %c0_11 = arith.constant 0 : index
      %c0_12 = arith.constant 0 : index
      %19 = vector.load %arg4[%c1, %c0_11, %c0_12] : memref<3x8x128xf32, #tpu.memory_space<vmem>>, vector<1x8x128xf32>
      %20 = vector.shape_cast %19 : vector<1x8x128xf32> to vector<8x128xf32>
      %c2 = arith.constant 2 : index
      %c0_13 = arith.constant 0 : index
      %c0_14 = arith.constant 0 : index
      %21 = vector.load %arg4[%c2, %c0_13, %c0_14] : memref<3x8x128xf32, #tpu.memory_space<vmem>>, vector<1x8x128xf32>
      %22 = vector.shape_cast %21 : vector<1x8x128xf32> to vector<8x128xf32>
      %23 = arith.mulf %18, %18 : vector<8x128xf32>
      %24 = arith.mulf %20, %20 : vector<8x128xf32>
      %25 = arith.addf %23, %24 : vector<8x128xf32>
      %26 = arith.mulf %22, %22 : vector<8x128xf32>
      %27 = arith.addf %25, %26 : vector<8x128xf32>
      %28 = math.sqrt %27 : vector<8x128xf32>
      %c0_15 = arith.constant 0 : index
      %c0_16 = arith.constant 0 : index
      %29 = vector.load %arg15[%c0_15, %c0_16] : memref<8x128xf32, #tpu.memory_space<vmem>>, vector<8x128xf32>
      %cst = arith.constant 1.000000e+00 : f32
      %30 = vector.broadcast %cst : f32 to vector<8x128xf32>
      %31 = arith.subf %28, %30 : vector<8x128xf32>
      %32 = arith.mulf %31, %31 : vector<8x128xf32>
      %33 = arith.addf %29, %32 : vector<8x128xf32>
      %c0_17 = arith.constant 0 : index
      %c0_18 = arith.constant 0 : index
      %34 = vector.load %arg15[%c0_17, %c0_18] : memref<8x128xf32, #tpu.memory_space<vmem>>, vector<8x128xf32>
      tpu.vector_store %arg15[%c0_17, %c0_18], %33 {strides = array<i32>} : memref<8x128xf32, #tpu.memory_space<vmem>>, vector<8x128xf32>,
    } else {
    }
    %c0_i32_7 = arith.constant 0 : i32
    %14 = arith.cmpi eq, %arg1, %c0_i32_7 : i32
    %15 = arith.extui %14 : i1 to i32
    %c0_i32_8 = arith.constant 0 : i32
    %16 = arith.cmpi ne, %15, %c0_i32_8 : i32
    scf.if %16 {
      %17 = tpu.iota {dimensions = array<i32: 1>} : vector<8x128xi32>
      %c0 = arith.constant 0 : index
      %c0_9 = arith.constant 0 : index
      %18 = vector.load %arg10[%c0, %c0_9] : memref<8x128xf32, #tpu.memory_space<vmem>>, vector<8x128xf32>
      %cst = arith.constant dense<0.000000e+00> : vector<8xf32>
      %19 = vector.multi_reduction <add>, %18, %cst [1] : vector<8x128xf32> to vector<8xf32>
      %20 = vector.shape_cast %19 : vector<8xf32> to vector<8x1xf32>
      %cst_10 = arith.constant dense<0.000000e+00> : vector<1xf32>
      %21 = vector.multi_reduction <add>, %20, %cst_10 [0] : vector<8x1xf32> to vector<1xf32>
      %22 = vector.shape_cast %21 : vector<1xf32> to vector<1x1xf32>
      %c0_i32_11 = arith.constant 0 : i32
      %23 = vector.broadcast %c0_i32_11 : i32 to vector<8x128xi32>
      %24 = arith.cmpi eq, %17, %23 : vector<8x128xi32>
      %cst_12 = arith.constant 0.000000e+00 : f32
      %25 = vector.shape_cast %22 : vector<1x1xf32> to vector<1x1xf32>
      %26 = vector.broadcast %25 : vector<1x1xf32> to vector<8x128xf32>
      %27 = vector.broadcast %cst_12 : f32 to vector<8x128xf32>
      %28 = arith.select %24, %26, %27 : vector<8x128xi1>, vector<8x128xf32>
      %c0_13 = arith.constant 0 : index
      %c0_14 = arith.constant 0 : index
      %29 = vector.load %arg11[%c0_13, %c0_14] : memref<8x128xf32, #tpu.memory_space<vmem>>, vector<8x128xf32>
      %cst_15 = arith.constant dense<0.000000e+00> : vector<8xf32>
      %30 = vector.multi_reduction <add>, %29, %cst_15 [1] : vector<8x128xf32> to vector<8xf32>
      %31 = vector.shape_cast %30 : vector<8xf32> to vector<8x1xf32>
      %cst_16 = arith.constant dense<0.000000e+00> : vector<1xf32>
      %32 = vector.multi_reduction <add>, %31, %cst_16 [0] : vector<8x1xf32> to vector<1xf32>
      %33 = vector.shape_cast %32 : vector<1xf32> to vector<1x1xf32>
      %c1_i32_17 = arith.constant 1 : i32
      %34 = vector.broadcast %c1_i32_17 : i32 to vector<8x128xi32>
      %35 = arith.cmpi eq, %17, %34 : vector<8x128xi32>
      %cst_18 = arith.constant 0.000000e+00 : f32
      %36 = vector.shape_cast %33 : vector<1x1xf32> to vector<1x1xf32>
      %37 = vector.broadcast %36 : vector<1x1xf32> to vector<8x128xf32>
      %38 = vector.broadcast %cst_18 : f32 to vector<8x128xf32>
      %39 = arith.select %35, %37, %38 : vector<8x128xi1>, vector<8x128xf32>
      %40 = arith.addf %28, %39 : vector<8x128xf32>
      %c0_19 = arith.constant 0 : index
      %c0_20 = arith.constant 0 : index
      %41 = vector.load %arg12[%c0_19, %c0_20] : memref<8x128xf32, #tpu.memory_space<vmem>>, vector<8x128xf32>
      %cst_21 = arith.constant dense<0.000000e+00> : vector<8xf32>
      %42 = vector.multi_reduction <add>, %41, %cst_21 [1] : vector<8x128xf32> to vector<8xf32>
      %43 = vector.shape_cast %42 : vector<8xf32> to vector<8x1xf32>
      %cst_22 = arith.constant dense<0.000000e+00> : vector<1xf32>
      %44 = vector.multi_reduction <add>, %43, %cst_22 [0] : vector<8x1xf32> to vector<1xf32>
      %45 = vector.shape_cast %44 : vector<1xf32> to vector<1x1xf32>
      %c2_i32 = arith.constant 2 : i32
      %46 = vector.broadcast %c2_i32 : i32 to vector<8x128xi32>
      %47 = arith.cmpi eq, %17, %46 : vector<8x128xi32>
      %cst_23 = arith.constant 0.000000e+00 : f32
      %48 = vector.shape_cast %45 : vector<1x1xf32> to vector<1x1xf32>
      %49 = vector.broadcast %48 : vector<1x1xf32> to vector<8x128xf32>
      %50 = vector.broadcast %cst_23 : f32 to vector<8x128xf32>
      %51 = arith.select %47, %49, %50 : vector<8x128xi1>, vector<8x128xf32>
      %52 = arith.addf %40, %51 : vector<8x128xf32>
      %c0_24 = arith.constant 0 : index
      %c0_25 = arith.constant 0 : index
      %53 = vector.load %arg13[%c0_24, %c0_25] : memref<8x128xf32, #tpu.memory_space<vmem>>, vector<8x128xf32>
      %cst_26 = arith.constant dense<0.000000e+00> : vector<8xf32>
      %54 = vector.multi_reduction <add>, %53, %cst_26 [1] : vector<8x128xf32> to vector<8xf32>
      %55 = vector.shape_cast %54 : vector<8xf32> to vector<8x1xf32>
      %cst_27 = arith.constant dense<0.000000e+00> : vector<1xf32>
      %56 = vector.multi_reduction <add>, %55, %cst_27 [0] : vector<8x1xf32> to vector<1xf32>
      %57 = vector.shape_cast %56 : vector<1xf32> to vector<1x1xf32>
      %c3_i32 = arith.constant 3 : i32
      %58 = vector.broadcast %c3_i32 : i32 to vector<8x128xi32>
      %59 = arith.cmpi eq, %17, %58 : vector<8x128xi32>
      %cst_28 = arith.constant 0.000000e+00 : f32
      %60 = vector.shape_cast %57 : vector<1x1xf32> to vector<1x1xf32>
      %61 = vector.broadcast %60 : vector<1x1xf32> to vector<8x128xf32>
      %62 = vector.broadcast %cst_28 : f32 to vector<8x128xf32>
      %63 = arith.select %59, %61, %62 : vector<8x128xi1>, vector<8x128xf32>
      %64 = arith.addf %52, %63 : vector<8x128xf32>
      %c0_29 = arith.constant 0 : index
      %c0_30 = arith.constant 0 : index
      %65 = vector.load %arg14[%c0_29, %c0_30] : memref<8x128xf32, #tpu.memory_space<vmem>>, vector<8x128xf32>
      %cst_31 = arith.constant dense<0.000000e+00> : vector<8xf32>
      %66 = vector.multi_reduction <add>, %65, %cst_31 [1] : vector<8x128xf32> to vector<8xf32>
      %67 = vector.shape_cast %66 : vector<8xf32> to vector<8x1xf32>
      %cst_32 = arith.constant dense<0.000000e+00> : vector<1xf32>
      %68 = vector.multi_reduction <add>, %67, %cst_32 [0] : vector<8x1xf32> to vector<1xf32>
      %69 = vector.shape_cast %68 : vector<1xf32> to vector<1x1xf32>
      %c4_i32 = arith.constant 4 : i32
      %70 = vector.broadcast %c4_i32 : i32 to vector<8x128xi32>
      %71 = arith.cmpi eq, %17, %70 : vector<8x128xi32>
      %cst_33 = arith.constant 0.000000e+00 : f32
      %72 = vector.shape_cast %69 : vector<1x1xf32> to vector<1x1xf32>
      %73 = vector.broadcast %72 : vector<1x1xf32> to vector<8x128xf32>
      %74 = vector.broadcast %cst_33 : f32 to vector<8x128xf32>
      %75 = arith.select %71, %73, %74 : vector<8x128xi1>, vector<8x128xf32>
      %76 = arith.addf %64, %75 : vector<8x128xf32>
      %c0_34 = arith.constant 0 : index
      %c0_35 = arith.constant 0 : index
      %77 = vector.load %arg15[%c0_34, %c0_35] : memref<8x128xf32, #tpu.memory_space<vmem>>, vector<8x128xf32>
      %cst_36 = arith.constant dense<0.000000e+00> : vector<8xf32>
      %78 = vector.multi_reduction <add>, %77, %cst_36 [1] : vector<8x128xf32> to vector<8xf32>
      %79 = vector.shape_cast %78 : vector<8xf32> to vector<8x1xf32>
      %cst_37 = arith.constant dense<0.000000e+00> : vector<1xf32>
      %80 = vector.multi_reduction <add>, %79, %cst_37 [0] : vector<8x1xf32> to vector<1xf32>
      %81 = vector.shape_cast %80 : vector<1xf32> to vector<1x1xf32>
      %c5_i32 = arith.constant 5 : i32
      %82 = vector.broadcast %c5_i32 : i32 to vector<8x128xi32>
      %83 = arith.cmpi eq, %17, %82 : vector<8x128xi32>
      %cst_38 = arith.constant 0.000000e+00 : f32
      %84 = vector.shape_cast %81 : vector<1x1xf32> to vector<1x1xf32>
      %85 = vector.broadcast %84 : vector<1x1xf32> to vector<8x128xf32>
      %86 = vector.broadcast %cst_38 : f32 to vector<8x128xf32>
      %87 = arith.select %83, %85, %86 : vector<8x128xi1>, vector<8x128xf32>
      %88 = arith.addf %76, %87 : vector<8x128xf32>
      %c0_39 = arith.constant 0 : index
      %c0_40 = arith.constant 0 : index
      %c0_41 = arith.constant 0 : index
      %89 = vector.load %arg8[%c0_39, %c0_40, %c0_41] : memref<1x8x128xf32, #tpu.memory_space<vmem>>, vector<1x8x128xf32>
      %90 = vector.shape_cast %89 : vector<1x8x128xf32> to vector<8x128xf32>
      %91 = vector.shape_cast %88 : vector<8x128xf32> to vector<1x8x128xf32>
      tpu.vector_store %arg8[%c0_39, %c0_40, %c0_41], %91 {strides = array<i32>} : memref<1x8x128xf32, #tpu.memory_space<vmem>>, vector<1x8x128xf32>,
    } else {
    }
    return
  }
  func.func @transform_0(%arg0: i32, %arg1: i32) -> (i32, i32, i32) {
    %c1_i32 = arith.constant 1 : i32
    %0 = arith.muli %arg0, %c1_i32 : i32
    %1 = arith.addi %0, %arg1 : i32
    %c0_i32 = arith.constant 0 : i32
    %2 = arith.minsi %1, %c0_i32 : i32
    %c0_i32_0 = arith.constant 0 : i32
    %c0_i32_1 = arith.constant 0 : i32
    %c0_i32_2 = arith.constant 0 : i32
    return %c0_i32_0, %c0_i32_1, %2 : i32, i32, i32
  }
  func.func @transform_1(%arg0: i32, %arg1: i32) -> (i32, i32, i32) {
    %c1_i32 = arith.constant 1 : i32
    %0 = arith.muli %arg0, %c1_i32 : i32
    %1 = arith.addi %0, %arg1 : i32
    %c0_i32 = arith.constant 0 : i32
    %2 = arith.minsi %1, %c0_i32 : i32
    %c0_i32_0 = arith.constant 0 : i32
    %c0_i32_1 = arith.constant 0 : i32
    %c0_i32_2 = arith.constant 0 : i32
    return %c0_i32_0, %c0_i32_1, %2 : i32, i32, i32
  }
  func.func @transform_2(%arg0: i32, %arg1: i32) -> (i32, i32, i32) {
    %c1_i32 = arith.constant 1 : i32
    %0 = arith.muli %arg0, %c1_i32 : i32
    %1 = arith.addi %0, %arg1 : i32
    %c0_i32 = arith.constant 0 : i32
    %2 = arith.minsi %1, %c0_i32 : i32
    %c0_i32_0 = arith.constant 0 : i32
    %c0_i32_1 = arith.constant 0 : i32
    %c0_i32_2 = arith.constant 0 : i32
    return %c0_i32_0, %c0_i32_1, %2 : i32, i32, i32
  }
  func.func @transform_3(%arg0: i32, %arg1: i32) -> (i32, i32) {
    %c0_i32 = arith.constant 0 : i32
    %c0_i32_0 = arith.constant 0 : i32
    %c0_i32_1 = arith.constant 0 : i32
    return %c0_i32, %c0_i32_0 : i32, i32
  }
  func.func @transform_4(%arg0: i32, %arg1: i32) -> (i32, i32) {
    %c0_i32 = arith.constant 0 : i32
    %c0_i32_0 = arith.constant 0 : i32
    %c0_i32_1 = arith.constant 0 : i32
    return %c0_i32, %c0_i32_0 : i32, i32
  }
  func.func @transform_5(%arg0: i32, %arg1: i32) -> (i32, i32) {
    %c0_i32 = arith.constant 0 : i32
    %c0_i32_0 = arith.constant 0 : i32
    %c0_i32_1 = arith.constant 0 : i32
    return %c0_i32, %c0_i32_0 : i32, i32
  }
  func.func @transform_6(%arg0: i32, %arg1: i32) -> (i32, i32, i32) {
    %c0_i32 = arith.constant 0 : i32
    %c0_i32_0 = arith.constant 0 : i32
    %c0_i32_1 = arith.constant 0 : i32
    return %arg0, %c0_i32, %c0_i32_0 : i32, i32, i32
  }
  func.func @transform_7(%arg0: i32, %arg1: i32) -> (i32, i32, i32, i32) {
    %c0_i32 = arith.constant 0 : i32
    %c0_i32_0 = arith.constant 0 : i32
    %c0_i32_1 = arith.constant 0 : i32
    %c0_i32_2 = arith.constant 0 : i32
    return %arg0, %c0_i32, %c0_i32_0, %c0_i32_1 : i32, i32, i32, i32
  }
}

</mosaic_0001>

<llo_original>
// kernel: custom-call.13
$region0: #{custom-call.13}
  %s0 = inlined_call_operand.vmem [shape: f32[1,3,3], index: 0, kind: input, shape index: {}]
  %s1 = inlined_call_operand.vmem [shape: f32[1,3,3], index: 1, kind: output, shape index: {}]
  $region1: #{custom-call.13} parent=0
    #allocation0 [shape = 'u8[4096]{0}', space=vmem, size = 0x1000, scoped, tag = 'operand span for operand 0']
    #allocation1 [shape = 'u8[2048]{0}', space=vmem, size = 0x800, scoped, tag = 'packed  for operand 0']
    #allocation2 [shape = 'u8[4096]{0}', space=vmem, size = 0x1000, scoped, tag = 'operand span for operand 1']
    #allocation3 [shape = 'u8[2048]{0}', space=vmem, size = 0x800, scoped, tag = 'packed  for operand 1']
    #allocation4 [shape = 'f32[3,3]{1,0}', space=vmem, size = 0x1000, scoped, tag = 'rescaled input a']
    // Predicated region
    $region2: #{custom-call.13} parent=1 // pred_check
      _
    $region3: #{custom-call.13} parent=1 // pred_check_branch
      %3 = sbr.rel (0) target = $region5
    $region4: #{custom-call.13} parent=1 // pred_region
      // Predicated region
      $region6: #{custom-call.13} parent=4 // pred_check
        _
      $region7: #{custom-call.13} parent=4 // pred_check_branch
        %5 = sbr.rel target = $region9
      $region8: #{custom-call.13} parent=4 // pred_region
        // Predicated region
        $region21: #{custom-call.13} parent=8 // pred_check
          _
        $region22: #{custom-call.13} parent=8 // pred_check_branch
          %21 = sbr.rel (0) target = $region24
        $region23: #{custom-call.13} parent=8 // pred_region
          %s23 = ssub.s32 16, 1
          loop: start=0, step=1, limit=1
          $region25: #{custom-call.13} parent=23 // loop_pre_header
            _
          $region26: #{custom-call.13} parent=23 // loop_header
            %s25 = sphi 0, %s29
            %p26 = scmp.ge.s32.totalorder %s25, 1
            %s30 = sphi %s0, %s0
            %s31 = sphi [#allocation1], [#allocation1]
          $region27: #{custom-call.13} parent=23 // loop_header_branch
            %28 = sbr.rel (%p26) target = $region31
          $region28: #{custom-call.13} parent=23 // loop_body
            %v32 = vld [vmem:[%s30] sm:%s23]
            %33 = vst [vmem:[%s31] sm:%s23] %v32
          $region29: #{custom-call.13} parent=23 // loop_footer
            %s29 = sadd.s32 1, %s25
          $region30: #{custom-call.13} parent=23 // loop_footer_branch
            %24 = sbr.rel target = $region26
          $region31: #{custom-call.13} parent=23 // loop_exit
            _
        $region24: #{custom-call.13} parent=8 // pred_fallthru
          _
      $region9: #{custom-call.13} parent=4 // pred_fallthru
        _
      // Predicated region
      $region10: #{custom-call.13} parent=4 // pred_check
        _
      $region11: #{custom-call.13} parent=4 // pred_check_branch
        %7 = sbr.rel (0) target = $region13
      $region12: #{custom-call.13} parent=4 // pred_region
        %s9 = ssub.s32 16, 1
        loop: start=0, step=1, limit=1
        $region14: #{custom-call.13} parent=12 // loop_pre_header
          _
        $region15: #{custom-call.13} parent=12 // loop_header
          %s11 = sphi 0, %s15
          %p12 = scmp.ge.s32.totalorder %s11, 1
          %s16 = sphi %s0, %s0
          %s17 = sphi [#allocation1], [#allocation1]
        $region16: #{custom-call.13} parent=12 // loop_header_branch
          %14 = sbr.rel (%p12) target = $region20
        $region17: #{custom-call.13} parent=12 // loop_body
          %v18 = vld [vmem:[%s16] sm:%s9]
          %19 = vst [vmem:[%s17] sm:%s9] %v18
        $region18: #{custom-call.13} parent=12 // loop_footer
          %s15 = sadd.s32 1, %s11
        $region19: #{custom-call.13} parent=12 // loop_footer_branch
          %10 = sbr.rel target = $region15
        $region20: #{custom-call.13} parent=12 // loop_exit
          _
      $region13: #{custom-call.13} parent=4 // pred_fallthru
        _
    $region5: #{custom-call.13} parent=1 // pred_fallthru
      _
    %34 = vnop
    %s36 = sshll.u32 1, 4
    %s37 = ssub.s32 %s36, 1
    %v38 = vld [vmem:[#allocation1] sm:%s37]
    %39 = vst [vmem:[#allocation0] sm:%s37] %v38
    %v40 = vlaneseq
    %v41 = vand.u32 %v40, 127
    %vm42 = vcmp.lt.s32.totalorder %v41, 3
    %v43 = vlaneseq
    %v44 = vshrl.u32 %v43, 7
    %vm46 = vcmp.eq.s32.totalorder %v44, %v41
    %v47 = vld [vmem:[#allocation0] sm:$0xff]
    %v48 = vsel %vm46, %v47, 0.0
    %49 = vadd.xlane.f32.xlu0 %v48
    %v50 = vpop.xlane.xlu0 %49
    %vm51 = vcmp.ge.s32.totalorder %v44, %v41
    %vm52 = vmand %vm51, %vm42
    %v53 = vsel %vm52, %v47, 0.0
    %v54 = vrcp.pop %v50
    %v55 = vmul.f32 %v53, %v54
    %56 = vst [vmem:[#allocation4] sm:$0xff] %v55
    %v57 = vlaneseq
    %v58 = vand.u32 %v57, 127
    %v59 = vlaneseq
    %v60 = vshrl.u32 %v59, 7
    %vm62 = vcmp.eq.s32.totalorder %v58, %v60
    %v63 = vlaneseq
    %v64 = vand.u32 %v63, 127
    %vm65 = vcmp.eq.s32.totalorder %v64, 0
    %v66 = vsel %vm65, 1.0, -1.0
    %v67 = vsel %vm62, %v66, 0.0
    %s68 = scalar_lea.vmem [#allocation4], 1
    %v69 = vld [vmem:[%s68] ss:$0 sm:$0xff]
    %v70 = vxor.u32 %v69, 2147483648
    %v71 = vlaneseq
    %v72 = vand.u32 %v71, 127
    %vm73 = vcmp.eq.s32.totalorder %v72, 1
    %v74 = vmul.f32 %v70, %v67
    %75 = vadd.xlane.f32.xlu0 %v74
    %v76 = vpop.xlane.xlu0 %75
    %v77 = vsel %vm73, %v76, %v67
    %s78 = scalar_lea.vmem [#allocation4], 2
    %v79 = vld [vmem:[%s78] ss:$0 sm:$0xff]
    %v80 = vxor.u32 %v79, 2147483648
    %v81 = vlaneseq
    %v82 = vand.u32 %v81, 127
    %vm83 = vcmp.eq.s32.totalorder %v82, 2
    %v84 = vmul.f32 %v80, %v77
    %85 = vadd.xlane.f32.xlu0 %v84
    %v86 = vpop.xlane.xlu0 %85
    %v87 = vsel %vm83, %v86, %v77
    %v88 = vrcp.pop %v50
    %v89 = vmul.f32 %v87, %v88
    %vm90 = vweird.f32 %v50
    %v91 = vsel %vm90, %v87, %v89
    %92 = vst [vmem:[#allocation2] sm:$0xff] %v91
    %s94 = sshll.u32 1, 4
    %s95 = ssub.s32 %s94, 1
    %v97 = vld [vmem:[#allocation2] sm:%s95]
    %s98 = sshll.u32 1, 4
    %s99 = ssub.s32 %s98, 1
    %100 = vst [vmem:[#allocation3] sm:%s99] %v97
    // Predicated region
    $region32: #{custom-call.13} parent=1 // pred_check
      _
    $region33: #{custom-call.13} parent=1 // pred_check_branch
      %102 = sbr.rel (0) target = $region35
    $region34: #{custom-call.13} parent=1 // pred_region
      // Predicated region
      $region36: #{custom-call.13} parent=34 // pred_check
        _
      $region37: #{custom-call.13} parent=34 // pred_check_branch
        %104 = sbr.rel target = $region39
      $region38: #{custom-call.13} parent=34 // pred_region
        // Predicated region
        $region51: #{custom-call.13} parent=38 // pred_check
          _
        $region52: #{custom-call.13} parent=38 // pred_check_branch
          %120 = sbr.rel (0) target = $region54
        $region53: #{custom-call.13} parent=38 // pred_region
          %s122 = ssub.s32 16, 1
          loop: start=0, step=1, limit=1
          $region55: #{custom-call.13} parent=53 // loop_pre_header
            _
          $region56: #{custom-call.13} parent=53 // loop_header
            %s124 = sphi 0, %s128
            %p125 = scmp.ge.s32.totalorder %s124, 1
            %s129 = sphi [#allocation3], [#allocation3]
            %s130 = sphi %s1, %s1
          $region57: #{custom-call.13} parent=53 // loop_header_branch
            %127 = sbr.rel (%p125) target = $region61
          $region58: #{custom-call.13} parent=53 // loop_body
            %v131 = vld [vmem:[%s129] sm:%s122]
            %132 = vst [vmem:[%s130] sm:%s122] %v131
          $region59: #{custom-call.13} parent=53 // loop_footer
            %s128 = sadd.s32 1, %s124
          $region60: #{custom-call.13} parent=53 // loop_footer_branch
            %123 = sbr.rel target = $region56
          $region61: #{custom-call.13} parent=53 // loop_exit
            _
        $region54: #{custom-call.13} parent=38 // pred_fallthru
          _
      $region39: #{custom-call.13} parent=34 // pred_fallthru
        _
      // Predicated region
      $region40: #{custom-call.13} parent=34 // pred_check
        _
      $region41: #{custom-call.13} parent=34 // pred_check_branch
        %106 = sbr.rel (0) target = $region43
      $region42: #{custom-call.13} parent=34 // pred_region
        %s108 = ssub.s32 16, 1
        loop: start=0, step=1, limit=1
        $region44: #{custom-call.13} parent=42 // loop_pre_header
          _
        $region45: #{custom-call.13} parent=42 // loop_header
          %s110 = sphi 0, %s114
          %p111 = scmp.ge.s32.totalorder %s110, 1
          %s115 = sphi [#allocation3], [#allocation3]
          %s116 = sphi %s1, %s1
        $region46: #{custom-call.13} parent=42 // loop_header_branch
          %113 = sbr.rel (%p111) target = $region50
        $region47: #{custom-call.13} parent=42 // loop_body
          %v117 = vld [vmem:[%s115] sm:%s108]
          %118 = vst [vmem:[%s116] sm:%s108] %v117
        $region48: #{custom-call.13} parent=42 // loop_footer
          %s114 = sadd.s32 1, %s110
        $region49: #{custom-call.13} parent=42 // loop_footer_branch
          %109 = sbr.rel target = $region45
        $region50: #{custom-call.13} parent=42 // loop_exit
          _
      $region43: #{custom-call.13} parent=34 // pred_fallthru
        _
    $region35: #{custom-call.13} parent=1 // pred_fallthru
      _
    %133 = vnop

// kernel: custom-call.11
$region0: #{custom-call.11}
  %s0 = inlined_call_operand.hbm [shape: f32[3,3], index: 0, kind: input, shape index: {}]
  %s1 = inlined_call_operand.vmem [shape: f32[3,3], index: 1, kind: output, shape index: {0}]
  %s2 = inlined_call_operand.hbm [shape: s32[3], index: 2, kind: output, shape index: {1}]
  %s3 = inlined_call_operand.vmem [shape: s32[3], index: 3, kind: output, shape index: {2}]
  %4 = xla_tuple %s1, %s2, %s3
  $region1: #{custom-call.11} parent=0
    #allocation0 [shape = 'u8[4096]{0}', space=vmem, size = 0x1000, scoped, tag = 'operand span for operand 0']
    #allocation1 [shape = 'u8[2048]{0}', space=vmem, size = 0x800, scoped, tag = 'packed  for operand 0']
    #allocation2 [shape = 's32[1]{0}', space=sflag, size = 0x4, scoped, tag = 'scoped memory for custom-call.11']
    #allocation3 [shape = 's32[1]{0}', space=sflag, size = 0x4, scoped, tag = 'scoped memory for custom-call.11']
    #allocation4 [shape = 'u8[4096]{0}', space=vmem, size = 0x1000, scoped, tag = 'operand span for operand 1']
    #allocation5 [shape = 'u8[2048]{0}', space=vmem, size = 0x800, scoped, tag = 'packed  for operand 1']
    #allocation6 [shape = 'u8[4096]{0}', space=vmem, size = 0x1000, scoped, tag = 'operand span for operand 2']
    #allocation7 [shape = 'u8[512]{0}', space=vmem, size = 0x400, scoped, tag = 'packed  for operand 2']
    #allocation8 [shape = 'u8[4096]{0}', space=vmem, size = 0x1000, scoped, tag = 'operand span for operand 3']
    #allocation9 [shape = 'u8[512]{0}', space=vmem, size = 0x400, scoped, tag = 'packed  for operand 3']
    #allocation10 [shape = 's32[3,128]{1,0}', space=vmem, size = 0x1000, scoped, tag = 'scratch for permutations']
    %5 = vsyncpa [#allocation2], 0
    %6 = vsyncpa [#allocation3], 0
    %s8 = ssub.s32 64, 64
    %9 = vsyncadd [#allocation2], %s8
    %s10 = sshll.u32 [#allocation1], 4
    %s11 = int_to_ptr.vmem [resolvable:$true] %s10
    %13 = dma.hbm_to_vmem [thread:$0]  %s0, 64, %s11, [#allocation2]
    %14 = dma.done [#allocation2], 64
    %s16 = sshll.u32 1, 4
    %s17 = ssub.s32 %s16, 1
    %v18 = vld [vmem:[#allocation1] sm:%s17]
    %19 = vst [vmem:[#allocation0] sm:%s17] %v18
    %v20 = vld [vmem:[#allocation0] sm:$0xff]
    %21 = vst [vmem:[#allocation4] sm:$0xff] %v20
    %22 = vst [vmem:[#allocation6] sm:$0x1] 0
    %v23 = vlaneseq
    %v24 = vshrl.u32 %v23, 7
    %v25 = vmov %v24
    %27 = vst [vmem:[#allocation10] sm:$0xff] %v25
    loop: start=0, step=1, limit=3
    $region3: #{custom-call.11} parent=1 // loop_pre_header
      _
    $region4: #{custom-call.11} parent=1 // loop_header
      %s29 = sphi 0, %s33
      %p30 = scmp.ge.s32.totalorder %s29, 3
    $region5: #{custom-call.11} parent=1 // loop_header_branch
      %32 = sbr.rel (%p30) target = $region9
    $region6: #{custom-call.11} parent=1 // loop_body
      %v34 = vstv %s29
      %v35 = vlaneseq
      %v36 = vshrl.u32 %v35, 7
      %v37 = vmov %v36
      %v38 = vld [vmem:[#allocation4] sm:$0xff]
      %v39 = vand.u32 2147483647, %v38
      %v41 = vstv %s29
      %vm42 = vcmp.ge.s32.totalorder %v37, %v41
      %vm43 = vcmp.lt.s32.totalorder %v37, 3
      %vm44 = vmand %vm42, %vm43
      %vm45 = vcmp.lt.f32.partialorder -inf, %v39
      %vm46 = vmand %vm44, %vm45
      %v47 = vsel %vm46, %v37, %v34
      %v48 = vsel %vm46, %v39, -inf
      %v49 = vrot.slane %v48, 1
      %v50 = vrot.slane %v47, 1
      %vm51 = vcmp.ge.f32.partialorder %v49, %v48
      %v52 = vsel %vm51, %v49, %v48
      %v53 = vsel %vm51, %v50, %v47
      %v54 = vrot.slane %v49, 1
      %v55 = vrot.slane %v50, 1
      %vm56 = vcmp.ge.f32.partialorder %v54, %v52
      %v57 = vsel %vm56, %v54, %v52
      %v58 = vsel %vm56, %v55, %v53
      %v59 = vrot.slane %v54, 1
      %v60 = vrot.slane %v55, 1
      %vm61 = vcmp.ge.f32.partialorder %v59, %v57
      %v62 = vsel %vm61, %v59, %v57
      %v63 = vsel %vm61, %v60, %v58
      %v64 = vrot.slane %v59, 1
      %v65 = vrot.slane %v60, 1
      %vm66 = vcmp.ge.f32.partialorder %v64, %v62
      %v67 = vsel %vm66, %v64, %v62
      %v68 = vsel %vm66, %v65, %v63
      %v69 = vrot.slane %v64, 1
      %v70 = vrot.slane %v65, 1
      %vm71 = vcmp.ge.f32.partialorder %v69, %v67
      %v72 = vsel %vm71, %v69, %v67
      %v73 = vsel %vm71, %v70, %v68
      %v74 = vrot.slane %v69, 1
      %v75 = vrot.slane %v70, 1
      %vm76 = vcmp.ge.f32.partialorder %v74, %v72
      %v77 = vsel %vm76, %v74, %v72
      %v78 = vsel %vm76, %v75, %v73
      %v79 = vrot.slane %v74, 1
      %v80 = vrot.slane %v75, 1
      %vm81 = vcmp.ge.f32.partialorder %v79, %v77
      %v82 = vsel %vm81, %v79, %v77
      %v83 = vsel %vm81, %v80, %v78
      %s84 = ssub.s32 128, %s29
      %85 = vrot.lane.b32.xlu0 %v83, %s84
      %v86 = vpop.permute.xlu0 %85
      %s87 = vtos %v86
      %v88 = vstv %s29
      %v89 = vlaneseq
      %v90 = vand.u32 %v89, 127
      %vm91 = vcmp.eq.s32.totalorder %v90, %v88
      %v92 = vstv %s87
      %v93 = vld [vmem:[#allocation6] ss:$0 sm:$0xff]
      %v94 = vsel %vm91, %v92, %v93
      %95 = vst [vmem:[#allocation6] sm:$0x1] %v94
      %s96 = scalar_lea.vmem [#allocation4], %s29
      %s97 = scalar_lea.vmem [#allocation4], %s87
      %v98 = vld [vmem:[%s96] ss:$0 sm:$0xff]
      %v99 = vld [vmem:[%s97] ss:$0 sm:$0xff]
      %100 = vst [vmem:[%s97] sm:$0x1] %v98
      %101 = vst [vmem:[%s96] sm:$0x1] %v99
      %s102 = scalar_lea.vmem [#allocation10], %s29
      %s103 = scalar_lea.vmem [#allocation10], %s87
      %v104 = vld [vmem:[%s102] ss:$0 sm:$0xff]
      %v105 = vld [vmem:[%s103] ss:$0 sm:$0xff]
      %106 = vst [vmem:[%s103] sm:$0x1] %v104
      %107 = vst [vmem:[%s102] sm:$0x1] %v105
      %vm108 = vcmp.ne.f32.partialorder %v99, 0.0
      %vm109 = vmand %vm91, %vm108
      %v110 = vsel %vm109, %v99, 1.0
      %v111 = vlaneseq
      %v112 = vand.u32 %v111, 127
      %v113 = vstv %s29
      %vm114 = vcmp.gt.s32.totalorder %v112, %v113
      %v115 = vsel %vm114, %v99, 0.0
      %v116 = vlaneseq
      %v117 = vshrl.u32 %v116, 7
      %v118 = vmov %v117
      %v119 = vld [vmem:[#allocation4] sm:$0xff]
      %v121 = vstv %s29
      %vm122 = vcmp.gt.s32.totalorder %v118, %v121
      %v123 = vsel %vm122, %v110, 1.0
      %v124 = vrcp.pop %v123
      %v125 = vmul.f32 %v119, %v124
      %vm126 = vmand %vm122, %vm91
      %v127 = vsel %vm126, %v125, 0.0
      %128 = vadd.xlane.f32.xlu0 %v127
      %v129 = vpop.xlane.xlu0 %128
      %v130 = vmul.f32 %v129, %v115
      %v131 = vsub.f32 %v125, %v130
      %132 = vst [vmem:[#allocation4] sm:$0xff] %v131
    $region7: #{custom-call.11} parent=1 // loop_footer
      %s33 = sadd.s32 1, %s29
    $region8: #{custom-call.11} parent=1 // loop_footer_branch
      %28 = sbr.rel target = $region4
    $region9: #{custom-call.11} parent=1 // loop_exit
      _
    %v133 = vld [vmem:[#allocation10] sm:$0xff]
    %s134 = scalar_lea.vmem [#allocation10], 8
    %s135 = scalar_lea.vmem [#allocation10], 16
    %s136 = scalar_lea.vmem [#allocation10], 24
    %s137 = scalar_lea.vmem [#allocation10], 32
    %s138 = scalar_lea.vmem [#allocation10], 40
    %s139 = scalar_lea.vmem [#allocation10], 48
    %s140 = scalar_lea.vmem [#allocation10], 56
    %s141 = scalar_lea.vmem [#allocation10], 64
    %s142 = scalar_lea.vmem [#allocation10], 72
    %s143 = scalar_lea.vmem [#allocation10], 80
    %s144 = scalar_lea.vmem [#allocation10], 88
    %s145 = scalar_lea.vmem [#allocation10], 96
    %s146 = scalar_lea.vmem [#allocation10], 104
    %s147 = scalar_lea.vmem [#allocation10], 112
    %s148 = scalar_lea.vmem [#allocation10], 120
    %149 = vxpose.xlu0.b32.start [1/16] %v133, 128
    %150 = vxpose.xlu0.b32.cont [2/16] 0, 128
    %151 = vxpose.xlu0.b32.cont [3/16] 0, 128
    %152 = vxpose.xlu0.b32.cont [4/16] 0, 128
    %153 = vxpose.xlu0.b32.cont [5/16] 0, 128
    %154 = vxpose.xlu0.b32.cont [6/16] 0, 128
    %155 = vxpose.xlu0.b32.cont [7/16] 0, 128
    %156 = vxpose.xlu0.b32.cont [8/16] 0, 128
    %157 = vxpose.xlu0.b32.cont [9/16] 0, 128
    %158 = vxpose.xlu0.b32.cont [10/16] 0, 128
    %159 = vxpose.xlu0.b32.cont [11/16] 0, 128
    %160 = vxpose.xlu0.b32.cont [12/16] 0, 128
    %161 = vxpose.xlu0.b32.cont [13/16] 0, 128
    %162 = vxpose.xlu0.b32.cont [14/16] 0, 128
    %163 = vxpose.xlu0.b32.cont [15/16] 0, 128
    %164 = vxpose.xlu0.b32.end [16/16] 0, 128
    %v165 = vpop.trf.xlu0
    %v166 = vpop.trf.xlu0
    %v167 = vpop.trf.xlu0
    %v168 = vpop.trf.xlu0
    %v169 = vpop.trf.xlu0
    %v170 = vpop.trf.xlu0
    %v171 = vpop.trf.xlu0
    %v172 = vpop.trf.xlu0
    %v173 = vpop.trf.xlu0
    %v174 = vpop.trf.xlu0
    %v175 = vpop.trf.xlu0
    %v176 = vpop.trf.xlu0
    %v177 = vpop.trf.xlu0
    %v178 = vpop.trf.xlu0
    %v179 = vpop.trf.xlu0
    %v180 = vpop.trf.xlu0
    %181 = vst [vmem:[#allocation8] sm:$0x1] %v165
    %s183 = sshll.u32 1, 4
    %s184 = ssub.s32 %s183, 1
    %v186 = vld [vmem:[#allocation4] sm:%s184]
    %s187 = sshll.u32 1, 4
    %s188 = ssub.s32 %s187, 1
    %189 = vst [vmem:[#allocation5] sm:%s188] %v186
    %s191 = sshll.u32 1, 1
    %s192 = ssub.s32 %s191, 1
    %v194 = vld [vmem:[#allocation6] sm:%s192]
    %s195 = sshll.u32 1, 1
    %s196 = ssub.s32 %s195, 1
    %197 = vst [vmem:[#allocation7] sm:%s196] %v194
    %s199 = sshll.u32 1, 1
    %s200 = ssub.s32 %s199, 1
    %v202 = vld [vmem:[#allocation8] sm:%s200]
    %s203 = sshll.u32 1, 1
    %s204 = ssub.s32 %s203, 1
    %205 = vst [vmem:[#allocation9] sm:%s204] %v202
    %p207 = scmp.gt.s32.totalorder 4, 0
    // Predicated region
    $region10: #{custom-call.11} parent=1 // pred_check
      %p208 = pneg %p207
    $region11: #{custom-call.11} parent=1 // pred_check_branch
      %210 = sbr.rel (%p208) target = $region13
    $region12: #{custom-call.11} parent=1 // pred_region
      %s211 = sshra.s32 4, 3
      %p212 = scmp.gt.s32.totalorder %s211, 0
      // Predicated region
      $region14: #{custom-call.11} parent=12 // pred_check
        %p213 = pneg %p212
      $region15: #{custom-call.11} parent=12 // pred_check_branch
        %215 = sbr.rel (%p213) target = $region17
      $region16: #{custom-call.11} parent=12 // pred_region
        %s216 = ssub.s32 %s211, 1
        %s217 = smul.u32 %s216, 128
        %s218 = sshra.s32 %s217, 4
        %s219 = scalar_lea.vmem [#allocation5], %s218
        %v220 = vld [vmem:[#allocation5] sm:$0xff]
        // While loop
        $region18: #{custom-call.11} parent=16 // loop_pre_header
          _
        $region19: #{custom-call.11} parent=16 // loop_header
          %s221 = sphi [#allocation5], %s243
          %s222 = sphi %s1, %s244
          %v223 = vphi %v220, %v245
          %s224 = ssub.s32 %s219, 64
          %p225 = scmp.gt.s32.totalorder %s221, %s224
        $region20: #{custom-call.11} parent=16 // loop_header_branch
          %227 = sbr.rel (%p225) target = $region24
        $region21: #{custom-call.11} parent=16 // loop_body
          %228 = vst [vmem:[%s222] sm:$0xff] %v223
          %v229 = vld [vmem:[%s221 + $0x8] sm:$0xff]
          %230 = vst [vmem:[%s222 + $0x8] sm:$0xff] %v229
          %v231 = vld [vmem:[%s221 + $0x10] sm:$0xff]
          %232 = vst [vmem:[%s222 + $0x10] sm:$0xff] %v231
          %v233 = vld [vmem:[%s221 + $0x18] sm:$0xff]
          %234 = vst [vmem:[%s222 + $0x18] sm:$0xff] %v233
          %v235 = vld [vmem:[%s221 + $0x20] sm:$0xff]
          %236 = vst [vmem:[%s222 + $0x20] sm:$0xff] %v235
          %v237 = vld [vmem:[%s221 + $0x28] sm:$0xff]
          %238 = vst [vmem:[%s222 + $0x28] sm:$0xff] %v237
          %v239 = vld [vmem:[%s221 + $0x30] sm:$0xff]
          %240 = vst [vmem:[%s222 + $0x30] sm:$0xff] %v239
          %v241 = vld [vmem:[%s221 + $0x38] sm:$0xff]
          %242 = vst [vmem:[%s222 + $0x38] sm:$0xff] %v241
        $region22: #{custom-call.11} parent=16 // loop_footer
          %s243 = scalar_lea.vmem %s221, 64
          %s244 = scalar_lea.vmem %s222, 64
          %v245 = vld [vmem:[%s221 + $0x40] sm:$0xff]
        $region23: #{custom-call.11} parent=16 // loop_footer_branch
          %246 = sbr.rel target = $region19
        $region24: #{custom-call.11} parent=16 // loop_exit
          _
        // While loop
        $region25: #{custom-call.11} parent=16 // loop_pre_header
          _
        $region26: #{custom-call.11} parent=16 // loop_header
          %s247 = sphi %s221, %s255
          %s248 = sphi %s222, %s256
          %v249 = vphi %v223, %v249
          %p250 = scmp.gt.s32.totalorder %s247, %s219
        $region27: #{custom-call.11} parent=16 // loop_header_branch
          %252 = sbr.rel (%p250) target = $region31
        $region28: #{custom-call.11} parent=16 // loop_body
          %v253 = vld [vmem:[%s247] sm:$0xff]
          %254 = vst [vmem:[%s248] sm:$0xff] %v253
        $region29: #{custom-call.11} parent=16 // loop_footer
          %s255 = scalar_lea.vmem %s247, 8
          %s256 = scalar_lea.vmem %s248, 8
        $region30: #{custom-call.11} parent=16 // loop_footer_branch
          %257 = sbr.rel target = $region26
        $region31: #{custom-call.11} parent=16 // loop_exit
          _
      $region17: #{custom-call.11} parent=12 // pred_fallthru
        _
      %s258 = sand.u32 4, 7
      %s259 = sshll.u32 1, %s258
      %s260 = ssub.s32 %s259, 1
      %s261 = smul.u32 %s211, 128
      %s262 = sshra.s32 %s261, 4
      %s263 = scalar_lea.vmem %s1, %s262
      %s264 = smul.u32 %s211, 128
      %s265 = sshra.s32 %s264, 4
      %s266 = scalar_lea.vmem [#allocation5], %s265
      %v267 = vld [vmem:[%s266] sm:%s260]
      %268 = vst [vmem:[%s263] sm:%s260] %v267
    $region13: #{custom-call.11} parent=1 // pred_fallthru
      _
    // Predicated region
    $region32: #{custom-call.11} parent=1 // pred_check
      _
    $region33: #{custom-call.11} parent=1 // pred_check_branch
      %270 = sbr.rel (0) target = $region35
    $region34: #{custom-call.11} parent=1 // pred_region
      %s272 = ssub.s32 16, 16
      %273 = vsyncadd [#allocation3], %s272
      %s274 = sshll.u32 [#allocation7], 4
      %s275 = int_to_ptr.vmem [resolvable:$true] %s274
      %277 = dma.vmem_to_hbm [thread:$0]  %s275, 16, %s2, [#allocation3]
    $region35: #{custom-call.11} parent=1 // pred_fallthru
      _
    // Predicated region
    $region36: #{custom-call.11} parent=1 // pred_check
      _
    $region37: #{custom-call.11} parent=1 // pred_check_branch
      %279 = sbr.rel (0) target = $region39
    $region38: #{custom-call.11} parent=1 // pred_region
      %p281 = scmp.gt.s32.totalorder 1, 0
      // Predicated region
      $region40: #{custom-call.11} parent=38 // pred_check
        %p282 = pneg %p281
      $region41: #{custom-call.11} parent=38 // pred_check_branch
        %284 = sbr.rel (%p282) target = $region43
      $region42: #{custom-call.11} parent=38 // pred_region
        %s285 = sshra.s32 1, 3
        %p286 = scmp.gt.s32.totalorder %s285, 0
        // Predicated region
        $region44: #{custom-call.11} parent=42 // pred_check
          %p287 = pneg %p286
        $region45: #{custom-call.11} parent=42 // pred_check_branch
          %289 = sbr.rel (%p287) target = $region47
        $region46: #{custom-call.11} parent=42 // pred_region
          %s290 = ssub.s32 %s285, 1
          %s291 = smul.u32 %s290, 128
          %s292 = sshra.s32 %s291, 4
          %s293 = scalar_lea.vmem [#allocation9], %s292
          %v294 = vld [vmem:[#allocation9] sm:$0xff]
          // While loop
          $region48: #{custom-call.11} parent=46 // loop_pre_header
            _
          $region49: #{custom-call.11} parent=46 // loop_header
            %s295 = sphi [#allocation9], %s317
            %s296 = sphi %s3, %s318
            %v297 = vphi %v294, %v319
            %s298 = ssub.s32 %s293, 64
            %p299 = scmp.gt.s32.totalorder %s295, %s298
          $region50: #{custom-call.11} parent=46 // loop_header_branch
            %301 = sbr.rel (%p299) target = $region54
          $region51: #{custom-call.11} parent=46 // loop_body
            %302 = vst [vmem:[%s296] sm:$0xff] %v297
            %v303 = vld [vmem:[%s295 + $0x8] sm:$0xff]
            %304 = vst [vmem:[%s296 + $0x8] sm:$0xff] %v303
            %v305 = vld [vmem:[%s295 + $0x10] sm:$0xff]
            %306 = vst [vmem:[%s296 + $0x10] sm:$0xff] %v305
            %v307 = vld [vmem:[%s295 + $0x18] sm:$0xff]
            %308 = vst [vmem:[%s296 + $0x18] sm:$0xff] %v307
            %v309 = vld [vmem:[%s295 + $0x20] sm:$0xff]
            %310 = vst [vmem:[%s296 + $0x20] sm:$0xff] %v309
            %v311 = vld [vmem:[%s295 + $0x28] sm:$0xff]
            %312 = vst [vmem:[%s296 + $0x28] sm:$0xff] %v311
            %v313 = vld [vmem:[%s295 + $0x30] sm:$0xff]
            %314 = vst [vmem:[%s296 + $0x30] sm:$0xff] %v313
            %v315 = vld [vmem:[%s295 + $0x38] sm:$0xff]
            %316 = vst [vmem:[%s296 + $0x38] sm:$0xff] %v315
          $region52: #{custom-call.11} parent=46 // loop_footer
            %s317 = scalar_lea.vmem %s295, 64
            %s318 = scalar_lea.vmem %s296, 64
            %v319 = vld [vmem:[%s295 + $0x40] sm:$0xff]
          $region53: #{custom-call.11} parent=46 // loop_footer_branch
            %320 = sbr.rel target = $region49
          $region54: #{custom-call.11} parent=46 // loop_exit
            _
          // While loop
          $region55: #{custom-call.11} parent=46 // loop_pre_header
            _
          $region56: #{custom-call.11} parent=46 // loop_header
            %s321 = sphi %s295, %s329
            %s322 = sphi %s296, %s330
            %v323 = vphi %v297, %v323
            %p324 = scmp.gt.s32.totalorder %s321, %s293
          $region57: #{custom-call.11} parent=46 // loop_header_branch
            %326 = sbr.rel (%p324) target = $region61
          $region58: #{custom-call.11} parent=46 // loop_body
            %v327 = vld [vmem:[%s321] sm:$0xff]
            %328 = vst [vmem:[%s322] sm:$0xff] %v327
          $region59: #{custom-call.11} parent=46 // loop_footer
            %s329 = scalar_lea.vmem %s321, 8
            %s330 = scalar_lea.vmem %s322, 8
          $region60: #{custom-call.11} parent=46 // loop_footer_branch
            %331 = sbr.rel target = $region56
          $region61: #{custom-call.11} parent=46 // loop_exit
            _
        $region47: #{custom-call.11} parent=42 // pred_fallthru
          _
        %s332 = sand.u32 1, 7
        %s333 = sshll.u32 1, %s332
        %s334 = ssub.s32 %s333, 1
        %s335 = smul.u32 %s285, 128
        %s336 = sshra.s32 %s335, 4
        %s337 = scalar_lea.vmem %s3, %s336
        %s338 = smul.u32 %s285, 128
        %s339 = sshra.s32 %s338, 4
        %s340 = scalar_lea.vmem [#allocation9], %s339
        %v341 = vld [vmem:[%s340] sm:%s334]
        %342 = vst [vmem:[%s337] sm:%s334] %v341
      $region43: #{custom-call.11} parent=38 // pred_fallthru
        _
    $region39: #{custom-call.11} parent=1 // pred_fallthru
      _
    // Predicated region
    $region62: #{custom-call.11} parent=1 // pred_check
      _
    $region63: #{custom-call.11} parent=1 // pred_check_branch
      %344 = sbr.rel (0) target = $region65
    $region64: #{custom-call.11} parent=1 // pred_region
      %345 = dma.done [#allocation3], 16
    $region65: #{custom-call.11} parent=1 // pred_fallthru
      _
    // Predicated region
    $region66: #{custom-call.11} parent=1 // pred_check
      _
    $region67: #{custom-call.11} parent=1 // pred_check_branch
      %347 = sbr.rel (0) target = $region69
    $region68: #{custom-call.11} parent=1 // pred_region
      _
    $region69: #{custom-call.11} parent=1 // pred_fallthru
      _
    %348 = vsyncpa [#allocation2], 1
    %349 = vsyncpa [#allocation3], 1

// kernel: custom-call.12
$region0: #{custom-call.12}
  %s0 = inlined_call_operand.vmem [shape: f32[1,3,3], index: 0, kind: input, shape index: {}]
  %s1 = inlined_call_operand.vmem [shape: f32[1,3,3], index: 1, kind: output, shape index: {}]
  $region1: #{custom-call.12} parent=0
    #allocation0 [shape = 'u8[4096]{0}', space=vmem, size = 0x1000, scoped, tag = 'operand span for operand 0']
    #allocation1 [shape = 'u8[2048]{0}', space=vmem, size = 0x800, scoped, tag = 'packed  for operand 0']
    #allocation2 [shape = 'u8[4096]{0}', space=vmem, size = 0x1000, scoped, tag = 'operand span for operand 1']
    #allocation3 [shape = 'u8[2048]{0}', space=vmem, size = 0x800, scoped, tag = 'packed  for operand 1']
    #allocation4 [shape = 'f32[3,3]{1,0}', space=vmem, size = 0x1000, scoped, tag = 'rescaled input a']
    // Predicated region
    $region2: #{custom-call.12} parent=1 // pred_check
      _
    $region3: #{custom-call.12} parent=1 // pred_check_branch
      %3 = sbr.rel (0) target = $region5
    $region4: #{custom-call.12} parent=1 // pred_region
      // Predicated region
      $region6: #{custom-call.12} parent=4 // pred_check
        _
      $region7: #{custom-call.12} parent=4 // pred_check_branch
        %5 = sbr.rel target = $region9
      $region8: #{custom-call.12} parent=4 // pred_region
        // Predicated region
        $region21: #{custom-call.12} parent=8 // pred_check
          _
        $region22: #{custom-call.12} parent=8 // pred_check_branch
          %21 = sbr.rel (0) target = $region24
        $region23: #{custom-call.12} parent=8 // pred_region
          %s23 = ssub.s32 16, 1
          loop: start=0, step=1, limit=1
          $region25: #{custom-call.12} parent=23 // loop_pre_header
            _
          $region26: #{custom-call.12} parent=23 // loop_header
            %s25 = sphi 0, %s29
            %p26 = scmp.ge.s32.totalorder %s25, 1
            %s30 = sphi %s0, %s0
            %s31 = sphi [#allocation1], [#allocation1]
          $region27: #{custom-call.12} parent=23 // loop_header_branch
            %28 = sbr.rel (%p26) target = $region31
          $region28: #{custom-call.12} parent=23 // loop_body
            %v32 = vld [vmem:[%s30] sm:%s23]
            %33 = vst [vmem:[%s31] sm:%s23] %v32
          $region29: #{custom-call.12} parent=23 // loop_footer
            %s29 = sadd.s32 1, %s25
          $region30: #{custom-call.12} parent=23 // loop_footer_branch
            %24 = sbr.rel target = $region26
          $region31: #{custom-call.12} parent=23 // loop_exit
            _
        $region24: #{custom-call.12} parent=8 // pred_fallthru
          _
      $region9: #{custom-call.12} parent=4 // pred_fallthru
        _
      // Predicated region
      $region10: #{custom-call.12} parent=4 // pred_check
        _
      $region11: #{custom-call.12} parent=4 // pred_check_branch
        %7 = sbr.rel (0) target = $region13
      $region12: #{custom-call.12} parent=4 // pred_region
        %s9 = ssub.s32 16, 1
        loop: start=0, step=1, limit=1
        $region14: #{custom-call.12} parent=12 // loop_pre_header
          _
        $region15: #{custom-call.12} parent=12 // loop_header
          %s11 = sphi 0, %s15
          %p12 = scmp.ge.s32.totalorder %s11, 1
          %s16 = sphi %s0, %s0
          %s17 = sphi [#allocation1], [#allocation1]
        $region16: #{custom-call.12} parent=12 // loop_header_branch
          %14 = sbr.rel (%p12) target = $region20
        $region17: #{custom-call.12} parent=12 // loop_body
          %v18 = vld [vmem:[%s16] sm:%s9]
          %19 = vst [vmem:[%s17] sm:%s9] %v18
        $region18: #{custom-call.12} parent=12 // loop_footer
          %s15 = sadd.s32 1, %s11
        $region19: #{custom-call.12} parent=12 // loop_footer_branch
          %10 = sbr.rel target = $region15
        $region20: #{custom-call.12} parent=12 // loop_exit
          _
      $region13: #{custom-call.12} parent=4 // pred_fallthru
        _
    $region5: #{custom-call.12} parent=1 // pred_fallthru
      _
    %34 = vnop
    %s36 = sshll.u32 1, 4
    %s37 = ssub.s32 %s36, 1
    %v38 = vld [vmem:[#allocation1] sm:%s37]
    %39 = vst [vmem:[#allocation0] sm:%s37] %v38
    %v40 = vlaneseq
    %v41 = vand.u32 %v40, 127
    %vm42 = vcmp.lt.s32.totalorder %v41, 3
    %v43 = vlaneseq
    %v44 = vshrl.u32 %v43, 7
    %vm46 = vcmp.eq.s32.totalorder %v44, %v41
    %v47 = vld [vmem:[#allocation0] sm:$0xff]
    %v48 = vsel %vm46, %v47, 0.0
    %49 = vadd.xlane.f32.xlu0 %v48
    %v50 = vpop.xlane.xlu0 %49
    %vm51 = vcmp.le.s32.totalorder %v44, %v41
    %vm52 = vmand %vm51, %vm42
    %v53 = vsel %vm52, %v47, 0.0
    %v54 = vrcp.pop %v50
    %v55 = vmul.f32 %v53, %v54
    %56 = vst [vmem:[#allocation4] sm:$0xff] %v55
    %v57 = vlaneseq
    %v58 = vand.u32 %v57, 127
    %v59 = vlaneseq
    %v60 = vshrl.u32 %v59, 7
    %vm62 = vcmp.eq.s32.totalorder %v58, %v60
    %v63 = vlaneseq
    %v64 = vand.u32 %v63, 127
    %vm65 = vcmp.eq.s32.totalorder %v64, 2
    %v66 = vsel %vm65, 1.0, -1.0
    %v67 = vsel %vm62, %v66, 0.0
    %s68 = scalar_lea.vmem [#allocation4], 1
    %v69 = vld [vmem:[%s68] ss:$0 sm:$0xff]
    %v70 = vxor.u32 %v69, 2147483648
    %v71 = vlaneseq
    %v72 = vand.u32 %v71, 127
    %vm73 = vcmp.eq.s32.totalorder %v72, 1
    %v74 = vmul.f32 %v70, %v67
    %75 = vadd.xlane.f32.xlu0 %v74
    %v76 = vpop.xlane.xlu0 %75
    %v77 = vsel %vm73, %v76, %v67
    %v78 = vld [vmem:[#allocation4] ss:$0 sm:$0xff]
    %v79 = vxor.u32 %v78, 2147483648
    %v80 = vlaneseq
    %v81 = vand.u32 %v80, 127
    %vm82 = vcmp.eq.s32.totalorder %v81, 0
    %v83 = vmul.f32 %v79, %v77
    %84 = vadd.xlane.f32.xlu0 %v83
    %v85 = vpop.xlane.xlu0 %84
    %v86 = vsel %vm82, %v85, %v77
    %v87 = vrcp.pop %v50
    %v88 = vmul.f32 %v86, %v87
    %vm89 = vweird.f32 %v50
    %v90 = vsel %vm89, %v86, %v88
    %91 = vst [vmem:[#allocation2] sm:$0xff] %v90
    %s93 = sshll.u32 1, 4
    %s94 = ssub.s32 %s93, 1
    %v96 = vld [vmem:[#allocation2] sm:%s94]
    %s97 = sshll.u32 1, 4
    %s98 = ssub.s32 %s97, 1
    %99 = vst [vmem:[#allocation3] sm:%s98] %v96
    // Predicated region
    $region32: #{custom-call.12} parent=1 // pred_check
      _
    $region33: #{custom-call.12} parent=1 // pred_check_branch
      %101 = sbr.rel (0) target = $region35
    $region34: #{custom-call.12} parent=1 // pred_region
      // Predicated region
      $region36: #{custom-call.12} parent=34 // pred_check
        _
      $region37: #{custom-call.12} parent=34 // pred_check_branch
        %103 = sbr.rel target = $region39
      $region38: #{custom-call.12} parent=34 // pred_region
        // Predicated region
        $region51: #{custom-call.12} parent=38 // pred_check
          _
        $region52: #{custom-call.12} parent=38 // pred_check_branch
          %119 = sbr.rel (0) target = $region54
        $region53: #{custom-call.12} parent=38 // pred_region
          %s121 = ssub.s32 16, 1
          loop: start=0, step=1, limit=1
          $region55: #{custom-call.12} parent=53 // loop_pre_header
            _
          $region56: #{custom-call.12} parent=53 // loop_header
            %s123 = sphi 0, %s127
            %p124 = scmp.ge.s32.totalorder %s123, 1
            %s128 = sphi [#allocation3], [#allocation3]
            %s129 = sphi %s1, %s1
          $region57: #{custom-call.12} parent=53 // loop_header_branch
            %126 = sbr.rel (%p124) target = $region61
          $region58: #{custom-call.12} parent=53 // loop_body
            %v130 = vld [vmem:[%s128] sm:%s121]
            %131 = vst [vmem:[%s129] sm:%s121] %v130
          $region59: #{custom-call.12} parent=53 // loop_footer
            %s127 = sadd.s32 1, %s123
          $region60: #{custom-call.12} parent=53 // loop_footer_branch
            %122 = sbr.rel target = $region56
          $region61: #{custom-call.12} parent=53 // loop_exit
            _
        $region54: #{custom-call.12} parent=38 // pred_fallthru
          _
      $region39: #{custom-call.12} parent=34 // pred_fallthru
        _
      // Predicated region
      $region40: #{custom-call.12} parent=34 // pred_check
        _
      $region41: #{custom-call.12} parent=34 // pred_check_branch
        %105 = sbr.rel (0) target = $region43
      $region42: #{custom-call.12} parent=34 // pred_region
        %s107 = ssub.s32 16, 1
        loop: start=0, step=1, limit=1
        $region44: #{custom-call.12} parent=42 // loop_pre_header
          _
        $region45: #{custom-call.12} parent=42 // loop_header
          %s109 = sphi 0, %s113
          %p110 = scmp.ge.s32.totalorder %s109, 1
          %s114 = sphi [#allocation3], [#allocation3]
          %s115 = sphi %s1, %s1
        $region46: #{custom-call.12} parent=42 // loop_header_branch
          %112 = sbr.rel (%p110) target = $region50
        $region47: #{custom-call.12} parent=42 // loop_body
          %v116 = vld [vmem:[%s114] sm:%s107]
          %117 = vst [vmem:[%s115] sm:%s107] %v116
        $region48: #{custom-call.12} parent=42 // loop_footer
          %s113 = sadd.s32 1, %s109
        $region49: #{custom-call.12} parent=42 // loop_footer_branch
          %108 = sbr.rel target = $region45
        $region50: #{custom-call.12} parent=42 // loop_exit
          _
      $region43: #{custom-call.12} parent=34 // pred_fallthru
        _
    $region35: #{custom-call.12} parent=1 // pred_fallthru
      _
    %132 = vnop

// kernel: _volsdf_forward.1
$region0: #{_volsdf_forward.1}
  #allocation0 [shape = 'u32[]', space=smem, size = 0x4, offset = 0x4, fixed_abs, tag = 'smem constant byte address 0x4 - core index']
  #allocation1 [shape = 'u32[144,128]{1,0:T(1,128)}', space=vmem, size = 0x12000, scoped, tag = 'internal scratch']
  #allocation2 [shape = 'f32[8,128]{1,0:T(8,128)}', space=vmem, size = 0x1000, scoped, tag = 'scratch operand']
  #allocation3 [shape = 'f32[8,128]{1,0:T(8,128)}', space=vmem, size = 0x1000, scoped, tag = 'scratch operand']
  #allocation4 [shape = 'f32[8,128]{1,0:T(8,128)}', space=vmem, size = 0x1000, scoped, tag = 'scratch operand']
  #allocation5 [shape = 'f32[8,128]{1,0:T(8,128)}', space=vmem, size = 0x1000, scoped, tag = 'scratch operand']
  #allocation6 [shape = 'f32[8,128]{1,0:T(8,128)}', space=vmem, size = 0x1000, scoped, tag = 'scratch operand']
  #allocation7 [shape = 'f32[8,128]{1,0:T(8,128)}', space=vmem, size = 0x1000, scoped, tag = 'scratch operand']
  %s0 = inlined_call_operand.vmem [shape: f32[14,8,128], index: 0, kind: input, shape index: {}]
  %s1 = inlined_call_operand.vmem [shape: f32[6,8,128], index: 1, kind: input, shape index: {}]
  %s2 = inlined_call_operand.vmem [shape: f32[3,8,128], index: 2, kind: input, shape index: {}]
  %s3 = inlined_call_operand.vmem [shape: f32[8,8], index: 3, kind: input, shape index: {}]
  %s4 = inlined_call_operand.vmem [shape: f32[8,128], index: 4, kind: input, shape index: {}]
  %s5 = inlined_call_operand.vmem [shape: f32[3,3], index: 5, kind: input, shape index: {}]
  %s6 = inlined_call_operand.vmem [shape: f32[2,8,128], index: 6, kind: output, shape index: {0}]
  %s7 = inlined_call_operand.vmem [shape: f32[2,4,8,128], index: 7, kind: output, shape index: {1}]
  %8 = xla_tuple %s6, %s7
  %s9 = sld [smem:[#allocation0]]
  $region81: #{_volsdf_forward.1} parent=0
    _
  %s11 = ssub.s32 1, %s9
  %s12 = scalar_select 0, %s11, %s9
  $region1: #{_volsdf_forward.1} parent=0
    #allocation8 [shape = 'u8[2048]{0}', space=smem, size = 0x800, scoped, tag = 'input window, operand 5, single buffered']
    #allocation9 [shape = 's32[2]{0}', space=sflag, size = 0x8, scoped, tag = 'scoped memory for _volsdf_forward.1']
    %13 = vsyncpa [#allocation9], 0
    loop: start=0, step=1, limit=4
    $region2: #{_volsdf_forward.1} parent=1 // loop_pre_header
      _
    $region3: #{_volsdf_forward.1} parent=1 // loop_header
      %s15 = sphi 0, %s19
      %p16 = scmp.ge.s32.totalorder %s15, 4
      %s22 = sphi 0, %s34
      %s23 = sphi 0, %s30
      %s24 = sphi 0, %s22
      %s25 = sphi 0, %s23
      %s26 = sphi 0, %s24
      %s27 = sphi 0, %s25
      %s43 = sphi 0, %s45
      %s46 = sphi 0, %s43
      %s47 = sphi 0, %s46
      %s63 = sphi 0, %s47
      %s75 = sphi 0, %s77
      %s78 = sphi 0, %s75
      %s79 = sphi 0, %s78
      %s95 = sphi 0, %s79
      %s107 = sphi 0, %s109
      %s110 = sphi 0, %s107
      %s111 = sphi 0, %s110
      %s127 = sphi 0, %s111
      %s131 = sphi 0, %s131
      %s133 = sphi 0, %s131
      %s134 = sphi 0, %s133
      %s148 = sphi 0, %s134
      %s152 = sphi 0, %s152
      %s154 = sphi 0, %s152
      %s155 = sphi 0, %s154
      %s169 = sphi 0, %s155
      %s173 = sphi 0, %s173
      %s175 = sphi 0, %s173
      %s176 = sphi 0, %s175
      %s190 = sphi 0, %s176
      %s196 = sphi 0, %s198
      %s199 = sphi 0, %s196
      %s200 = sphi 0, %s199
      %s216 = sphi 0, %s200
      %s222 = sphi 0, %s224
      %s225 = sphi 0, %s222
      %s226 = sphi 0, %s225
      %s242 = sphi 0, %s226
    $region4: #{_volsdf_forward.1} parent=1 // loop_header_branch
      %18 = sbr.rel (%p16) target = $region8
    $region5: #{_volsdf_forward.1} parent=1 // loop_body
      %s20 = ssub.s32 %s15, 1
      %s21 = ssub.s32 %s15, 2
      %s28 = sadd.s32 1, %s23
      %p29 = scmp.ge.s32.totalorder %s28, 1
      %s30 = scalar_select %p29, 0, %s28
      %s31 = sadd.s32 1, %s22
      %s32 = scalar_select %p29, %s31, %s22
      %p33 = scmp.ge.s32.totalorder %s32, 2
      %s34 = scalar_select %p33, 0, %s32
      %s35 = sadd.s32 %s22, %s23
      %p36 = scmp.lt.s32.totalorder %s35, 0
      %s37 = scalar_select %p36, %s35, 0
      %s38 = sadd.s32 %s34, %s30
      %p39 = scmp.lt.s32.totalorder %s38, 0
      %s40 = scalar_select %p39, %s38, 0
      %s41 = ssub.s32 %s37, %s40
      %p42 = scmp.eq.s32.totalorder %s41, 0
      %s44 = sadd.s32 %s43, 1
      %s45 = scalar_select %p42, %s43, %s44
      %p48 = pneg %p42
      %p49 = scmp.eq.s32.totalorder %s15, 1
      %p50 = por %p48, %p49
      %p51 = scmp.ne.s32.totalorder %s43, %s46
      %p52 = scmp.eq.s32.totalorder %s15, 0
      %p53 = por %p51, %p52
      %p54 = scmp.ne.s32.totalorder %s43, %s46
      %p55 = scmp.eq.s32.totalorder %s20, 1
      %p56 = por %p54, %p55
      %p57 = scmp.ne.s32.totalorder %s46, %s47
      %p58 = scmp.eq.s32.totalorder %s20, 0
      %p59 = por %p57, %p58
      %p60 = scmp.ne.s32.totalorder %s46, %s47
      %p61 = scmp.eq.s32.totalorder %s21, 1
      %p62 = por %p60, %p61
      %p64 = scmp.ne.s32.totalorder %s47, %s63
      %p65 = scmp.eq.s32.totalorder %s21, 0
      %p66 = por %p64, %p65
      %s67 = sadd.s32 %s22, %s23
      %p68 = scmp.lt.s32.totalorder %s67, 0
      %s69 = scalar_select %p68, %s67, 0
      %s70 = sadd.s32 %s34, %s30
      %p71 = scmp.lt.s32.totalorder %s70, 0
      %s72 = scalar_select %p71, %s70, 0
      %s73 = ssub.s32 %s69, %s72
      %p74 = scmp.eq.s32.totalorder %s73, 0
      %s76 = sadd.s32 %s75, 1
      %s77 = scalar_select %p74, %s75, %s76
      %p80 = pneg %p74
      %p81 = scmp.eq.s32.totalorder %s15, 1
      %p82 = por %p80, %p81
      %p83 = scmp.ne.s32.totalorder %s75, %s78
      %p84 = scmp.eq.s32.totalorder %s15, 0
      %p85 = por %p83, %p84
      %p86 = scmp.ne.s32.totalorder %s75, %s78
      %p87 = scmp.eq.s32.totalorder %s20, 1
      %p88 = por %p86, %p87
      %p89 = scmp.ne.s32.totalorder %s78, %s79
      %p90 = scmp.eq.s32.totalorder %s20, 0
      %p91 = por %p89, %p90
      %p92 = scmp.ne.s32.totalorder %s78, %s79
      %p93 = scmp.eq.s32.totalorder %s21, 1
      %p94 = por %p92, %p93
      %p96 = scmp.ne.s32.totalorder %s79, %s95
      %p97 = scmp.eq.s32.totalorder %s21, 0
      %p98 = por %p96, %p97
      %s99 = sadd.s32 %s22, %s23
      %p100 = scmp.lt.s32.totalorder %s99, 0
      %s101 = scalar_select %p100, %s99, 0
      %s102 = sadd.s32 %s34, %s30
      %p103 = scmp.lt.s32.totalorder %s102, 0
      %s104 = scalar_select %p103, %s102, 0
      %s105 = ssub.s32 %s101, %s104
      %p106 = scmp.eq.s32.totalorder %s105, 0
      %s108 = sadd.s32 %s107, 1
      %s109 = scalar_select %p106, %s107, %s108
      %p112 = pneg %p106
      %p113 = scmp.eq.s32.totalorder %s15, 1
      %p114 = por %p112, %p113
      %p115 = scmp.ne.s32.totalorder %s107, %s110
      %p116 = scmp.eq.s32.totalorder %s15, 0
      %p117 = por %p115, %p116
      %p118 = scmp.ne.s32.totalorder %s107, %s110
      %p119 = scmp.eq.s32.totalorder %s20, 1
      %p120 = por %p118, %p119
      %p121 = scmp.ne.s32.totalorder %s110, %s111
      %p122 = scmp.eq.s32.totalorder %s20, 0
      %p123 = por %p121, %p122
      %p124 = scmp.ne.s32.totalorder %s110, %s111
      %p125 = scmp.eq.s32.totalorder %s21, 1
      %p126 = por %p124, %p125
      %p128 = scmp.ne.s32.totalorder %s111, %s127
      %p129 = scmp.eq.s32.totalorder %s21, 0
      %p130 = por %p128, %p129
      %s132 = sadd.s32 %s131, 1
      %p135 = scmp.eq.s32.totalorder %s15, 1
      %p136 = scmp.ne.s32.totalorder %s131, %s133
      %p137 = scmp.eq.s32.totalorder %s15, 0
      %p138 = por %p136, %p137
      %p139 = scmp.ne.s32.totalorder %s131, %s133
      %p140 = scmp.eq.s32.totalorder %s20, 1
      %p141 = por %p139, %p140
      %p142 = scmp.ne.s32.totalorder %s133, %s134
      %p143 = scmp.eq.s32.totalorder %s20, 0
      %p144 = por %p142, %p143
      %p145 = scmp.ne.s32.totalorder %s133, %s134
      %p146 = scmp.eq.s32.totalorder %s21, 1
      %p147 = por %p145, %p146
      %p149 = scmp.ne.s32.totalorder %s134, %s148
      %p150 = scmp.eq.s32.totalorder %s21, 0
      %p151 = por %p149, %p150
      %s153 = sadd.s32 %s152, 1
      %p156 = scmp.eq.s32.totalorder %s15, 1
      %p157 = scmp.ne.s32.totalorder %s152, %s154
      %p158 = scmp.eq.s32.totalorder %s15, 0
      %p159 = por %p157, %p158
      %p160 = scmp.ne.s32.totalorder %s152, %s154
      %p161 = scmp.eq.s32.totalorder %s20, 1
      %p162 = por %p160, %p161
      %p163 = scmp.ne.s32.totalorder %s154, %s155
      %p164 = scmp.eq.s32.totalorder %s20, 0
      %p165 = por %p163, %p164
      %p166 = scmp.ne.s32.totalorder %s154, %s155
      %p167 = scmp.eq.s32.totalorder %s21, 1
      %p168 = por %p166, %p167
      %p170 = scmp.ne.s32.totalorder %s155, %s169
      %p171 = scmp.eq.s32.totalorder %s21, 0
      %p172 = por %p170, %p171
      %s174 = sadd.s32 %s173, 1
      %p177 = scmp.eq.s32.totalorder %s15, 1
      %p178 = scmp.ne.s32.totalorder %s173, %s175
      %p179 = scmp.eq.s32.totalorder %s15, 0
      %p180 = por %p178, %p179
      %p181 = scmp.ne.s32.totalorder %s173, %s175
      %p182 = scmp.eq.s32.totalorder %s20, 1
      %p183 = por %p181, %p182
      %p184 = scmp.ne.s32.totalorder %s175, %s176
      %p185 = scmp.eq.s32.totalorder %s20, 0
      %p186 = por %p184, %p185
      %p187 = scmp.ne.s32.totalorder %s175, %s176
      %p188 = scmp.eq.s32.totalorder %s21, 1
      %p189 = por %p187, %p188
      %p191 = scmp.ne.s32.totalorder %s176, %s190
      %p192 = scmp.eq.s32.totalorder %s21, 0
      %p193 = por %p191, %p192
      %s194 = ssub.s32 %s22, %s34
      %p195 = scmp.eq.s32.totalorder %s194, 0
      %s197 = sadd.s32 %s196, 1
      %s198 = scalar_select %p195, %s196, %s197
      %p201 = pneg %p195
      %p202 = scmp.eq.s32.totalorder %s15, 1
      %p203 = por %p201, %p202
      %p204 = scmp.ne.s32.totalorder %s196, %s199
      %p205 = scmp.eq.s32.totalorder %s15, 0
      %p206 = por %p204, %p205
      %p207 = scmp.ne.s32.totalorder %s196, %s199
      %p208 = scmp.eq.s32.totalorder %s20, 1
      %p209 = por %p207, %p208
      %p210 = scmp.ne.s32.totalorder %s199, %s200
      %p211 = scmp.eq.s32.totalorder %s20, 0
      %p212 = por %p210, %p211
      %p213 = scmp.ne.s32.totalorder %s199, %s200
      %p214 = scmp.eq.s32.totalorder %s21, 1
      %p215 = por %p213, %p214
      %p217 = scmp.ne.s32.totalorder %s200, %s216
      %p218 = scmp.eq.s32.totalorder %s21, 0
      %p219 = por %p217, %p218
      %s220 = ssub.s32 %s22, %s34
      %p221 = scmp.eq.s32.totalorder %s220, 0
      %s223 = sadd.s32 %s222, 1
      %s224 = scalar_select %p221, %s222, %s223
      %p227 = pneg %p221
      %p228 = scmp.eq.s32.totalorder %s15, 1
      %p229 = por %p227, %p228
      %p230 = scmp.ne.s32.totalorder %s222, %s225
      %p231 = scmp.eq.s32.totalorder %s15, 0
      %p232 = por %p230, %p231
      %p233 = scmp.ne.s32.totalorder %s222, %s225
      %p234 = scmp.eq.s32.totalorder %s20, 1
      %p235 = por %p233, %p234
      %p236 = scmp.ne.s32.totalorder %s225, %s226
      %p237 = scmp.eq.s32.totalorder %s20, 0
      %p238 = por %p236, %p237
      %p239 = scmp.ne.s32.totalorder %s225, %s226
      %p240 = scmp.eq.s32.totalorder %s21, 1
      %p241 = por %p239, %p240
      %p243 = scmp.ne.s32.totalorder %s226, %s242
      %p244 = scmp.eq.s32.totalorder %s21, 0
      %p245 = por %p243, %p244
      %p246 = scmp.le.s32.totalorder 1, %s15
      %p247 = scmp.lt.s32.totalorder %s15, 3
      %p248 = pnand %p246, %p247
      %p249 = pneg %p248
      // Predicated region
      $region9: #{_volsdf_forward.1} parent=5 // pred_check
        _
      $region10: #{_volsdf_forward.1} parent=5 // pred_check_branch
        %251 = sbr.rel (%p248) target = $region12
      $region11: #{_volsdf_forward.1} parent=5 // pred_region
        %s252 = ssub.s32 %s15, 1
        // Predicated region
        $region13: #{_volsdf_forward.1} parent=11 // pred_check
          %p253 = pneg %p144
        $region14: #{_volsdf_forward.1} parent=11 // pred_check_branch
          %255 = sbr.rel (%p253) target = $region16
        $region15: #{_volsdf_forward.1} parent=11 // pred_region
          _
        $region16: #{_volsdf_forward.1} parent=11 // pred_fallthru
          _
        // Predicated region
        $region17: #{_volsdf_forward.1} parent=11 // pred_check
          %p256 = pneg %p165
        $region18: #{_volsdf_forward.1} parent=11 // pred_check_branch
          %258 = sbr.rel (%p256) target = $region20
        $region19: #{_volsdf_forward.1} parent=11 // pred_region
          _
        $region20: #{_volsdf_forward.1} parent=11 // pred_fallthru
          _
        // Predicated region
        $region21: #{_volsdf_forward.1} parent=11 // pred_check
          %p259 = pneg %p186
        $region22: #{_volsdf_forward.1} parent=11 // pred_check_branch
          %261 = sbr.rel (%p259) target = $region24
        $region23: #{_volsdf_forward.1} parent=11 // pred_region
          %s263 = ssub.s32 64, 64
          %264 = vsyncadd [#allocation9], %s263
          %s266 = sshll.u32 %s5, 4
          %s267 = int_to_ptr.vmem [resolvable:$true] %s266
          %269 = dma.vmem_to_smem %s267, 64, [#allocation8], [#allocation9]
        $region24: #{_volsdf_forward.1} parent=11 // pred_fallthru
          _
      $region12: #{_volsdf_forward.1} parent=5 // pred_fallthru
        _
      %p270 = scmp.lt.s32.totalorder %s15, 2
      // Predicated region
      $region25: #{_volsdf_forward.1} parent=5 // pred_check
        %p271 = pneg %p270
      $region26: #{_volsdf_forward.1} parent=5 // pred_check_branch
        %273 = sbr.rel (%p271) target = $region28
      $region27: #{_volsdf_forward.1} parent=5 // pred_region
        // Predicated region
        $region29: #{_volsdf_forward.1} parent=27 // pred_check
          %p274 = pneg %p53
        $region30: #{_volsdf_forward.1} parent=27 // pred_check_branch
          %276 = sbr.rel (%p274) target = $region32
        $region31: #{_volsdf_forward.1} parent=27 // pred_region
          %s277 = sadd.s32 %s22, %s23
          %p278 = scmp.lt.s32.totalorder %s277, 0
          %s279 = scalar_select %p278, %s277, 0
          %p280 = scmp.lt.s32.totalorder %s279, 0
          %s281 = scalar_select %p280, %s279, 0
          %s282 = smul.addr %s281, 8
          %s283 = scalar_lea.vmem %s0, %s282
          %s284 = sadd.s32 %s22, %s23
          %p285 = scmp.lt.s32.totalorder %s284, 0
          %s286 = scalar_select %p285, %s284, 0
        $region32: #{_volsdf_forward.1} parent=27 // pred_fallthru
          _
        // Predicated region
        $region33: #{_volsdf_forward.1} parent=27 // pred_check
          %p287 = pneg %p85
        $region34: #{_volsdf_forward.1} parent=27 // pred_check_branch
          %289 = sbr.rel (%p287) target = $region36
        $region35: #{_volsdf_forward.1} parent=27 // pred_region
          %s290 = sadd.s32 %s22, %s23
          %p291 = scmp.lt.s32.totalorder %s290, 0
          %s292 = scalar_select %p291, %s290, 0
          %p293 = scmp.lt.s32.totalorder %s292, 0
          %s294 = scalar_select %p293, %s292, 0
          %s295 = smul.addr %s294, 8
          %s296 = scalar_lea.vmem %s1, %s295
          %s297 = sadd.s32 %s22, %s23
          %p298 = scmp.lt.s32.totalorder %s297, 0
          %s299 = scalar_select %p298, %s297, 0
        $region36: #{_volsdf_forward.1} parent=27 // pred_fallthru
          _
        // Predicated region
        $region37: #{_volsdf_forward.1} parent=27 // pred_check
          %p300 = pneg %p117
        $region38: #{_volsdf_forward.1} parent=27 // pred_check_branch
          %302 = sbr.rel (%p300) target = $region40
        $region39: #{_volsdf_forward.1} parent=27 // pred_region
          %s303 = sadd.s32 %s22, %s23
          %p304 = scmp.lt.s32.totalorder %s303, 0
          %s305 = scalar_select %p304, %s303, 0
          %p306 = scmp.lt.s32.totalorder %s305, 0
          %s307 = scalar_select %p306, %s305, 0
          %s308 = smul.addr %s307, 8
          %s309 = scalar_lea.vmem %s2, %s308
          %s310 = sadd.s32 %s22, %s23
          %p311 = scmp.lt.s32.totalorder %s310, 0
          %s312 = scalar_select %p311, %s310, 0
        $region40: #{_volsdf_forward.1} parent=27 // pred_fallthru
          _
      $region28: #{_volsdf_forward.1} parent=5 // pred_fallthru
        _
      %p313 = scmp.le.s32.totalorder 1, %s15
      %p314 = scmp.lt.s32.totalorder %s15, 3
      %p315 = pnand %p313, %p314
      %p316 = pneg %p315
      // Predicated region
      $region41: #{_volsdf_forward.1} parent=5 // pred_check
        _
      $region42: #{_volsdf_forward.1} parent=5 // pred_check_branch
        %318 = sbr.rel (%p315) target = $region44
      $region43: #{_volsdf_forward.1} parent=5 // pred_region
        %s319 = ssub.s32 %s15, 1
        // Predicated region
        $region45: #{_volsdf_forward.1} parent=43 // pred_check
          %p320 = pneg %p186
        $region46: #{_volsdf_forward.1} parent=43 // pred_check_branch
          %322 = sbr.rel (%p320) target = $region48
        $region47: #{_volsdf_forward.1} parent=43 // pred_region
          %323 = dma.done [#allocation9], 64
        $region48: #{_volsdf_forward.1} parent=43 // pred_fallthru
          _
        %324 = sfence
        %s325 = sadd.s32 %s24, %s25
        %p326 = scmp.lt.s32.totalorder %s325, 0
        %s327 = scalar_select %p326, %s325, 0
        %p328 = scmp.lt.s32.totalorder %s327, 0
        %s329 = scalar_select %p328, %s327, 0
        %s330 = smul.addr %s329, 8
        %s331 = scalar_lea.vmem %s0, %s330
        %p332 = pneg %p59
        %p333 = pneg %p56
        %s334 = sadd.s32 %s24, %s25
        %p335 = scmp.lt.s32.totalorder %s334, 0
        %s336 = scalar_select %p335, %s334, 0
        %p337 = scmp.lt.s32.totalorder %s336, 0
        %s338 = scalar_select %p337, %s336, 0
        %s339 = smul.addr %s338, 8
        %s340 = scalar_lea.vmem %s1, %s339
        %p341 = pneg %p91
        %p342 = pneg %p88
        %s343 = sadd.s32 %s24, %s25
        %p344 = scmp.lt.s32.totalorder %s343, 0
        %s345 = scalar_select %p344, %s343, 0
        %p346 = scmp.lt.s32.totalorder %s345, 0
        %s347 = scalar_select %p346, %s345, 0
        %s348 = smul.addr %s347, 8
        %s349 = scalar_lea.vmem %s2, %s348
        %p350 = pneg %p123
        %p351 = pneg %p120
        %p352 = pneg %p144
        %p353 = pneg %p141
        %p354 = pneg %p165
        %p355 = pneg %p162
        %p356 = pneg %p186
        %p357 = pneg %p183
        %p358 = pneg %p212
        %p359 = pneg %p209
        %p360 = scmp.lt.s32.totalorder %s24, 1
        %s361 = scalar_select %p360, %s24, 1
        %s362 = smul.addr %s361, 8
        %s363 = scalar_lea.vmem %s6, %s362
        %p364 = pneg %p238
        %p365 = pneg %p235
        %p366 = scmp.lt.s32.totalorder %s24, 1
        %s367 = scalar_select %p366, %s24, 1
        %s368 = smul.addr %s367, 4
        %s369 = smul.addr %s368, 8
        %s370 = scalar_lea.vmem %s7, %s369
        %s371 = sadd.s32 %s24, %s25
        %p372 = scmp.lt.s32.totalorder %s371, 0
        %s373 = scalar_select %p372, %s371, 0
        %p374 = scmp.lt.s32.totalorder %s373, 0
        %s375 = scalar_select %p374, %s373, 0
        %s376 = smul.addr %s375, 8
        %s377 = scalar_lea.vmem %s0, %s376
        %s378 = sadd.s32 %s24, %s25
        %p379 = scmp.lt.s32.totalorder %s378, 0
        %s380 = scalar_select %p379, %s378, 0
        %s381 = sadd.s32 %s24, %s25
        %p382 = scmp.lt.s32.totalorder %s381, 0
        %s383 = scalar_select %p382, %s381, 0
        %p384 = scmp.lt.s32.totalorder %s383, 0
        %s385 = scalar_select %p384, %s383, 0
        %s386 = smul.addr %s385, 8
        %s387 = scalar_lea.vmem %s1, %s386
        %s388 = sadd.s32 %s24, %s25
        %p389 = scmp.lt.s32.totalorder %s388, 0
        %s390 = scalar_select %p389, %s388, 0
        %s391 = sadd.s32 %s24, %s25
        %p392 = scmp.lt.s32.totalorder %s391, 0
        %s393 = scalar_select %p392, %s391, 0
        %p394 = scmp.lt.s32.totalorder %s393, 0
        %s395 = scalar_select %p394, %s393, 0
        %s396 = smul.addr %s395, 8
        %s397 = scalar_lea.vmem %s2, %s396
        %s398 = sadd.s32 %s24, %s25
        %p399 = scmp.lt.s32.totalorder %s398, 0
        %s400 = scalar_select %p399, %s398, 0
        %p401 = scmp.lt.s32.totalorder %s24, 1
        %s402 = scalar_select %p401, %s24, 1
        %s403 = smul.addr %s402, 8
        %s404 = scalar_lea.vmem %s6, %s403
        %p405 = scmp.lt.s32.totalorder %s24, 1
        %s406 = scalar_select %p405, %s24, 1
        %s407 = smul.addr %s406, 4
        %s408 = smul.addr %s407, 8
        %s409 = scalar_lea.vmem %s7, %s408
        %s410 = sadd.s32 %s24, %s25
        %p411 = scmp.eq.s32.totalorder %s25, 0
        // Predicated region
        $region49: #{_volsdf_forward.1} parent=43 // pred_check
          %p412 = pneg %p411
        $region50: #{_volsdf_forward.1} parent=43 // pred_check_branch
          %414 = sbr.rel (%p412) target = $region52
        $region51: #{_volsdf_forward.1} parent=43 // pred_region
          %415 = vst [vmem:[#allocation2] sm:$0xff] 0.0
          %416 = vst [vmem:[#allocation3] sm:$0xff] 0.0
          %417 = vst [vmem:[#allocation4] sm:$0xff] 0.0
          %418 = vst [vmem:[#allocation5] sm:$0xff] 0.0
          %419 = vst [vmem:[#allocation6] sm:$0xff] 0.0
          %420 = vst [vmem:[#allocation7] sm:$0xff] 0.0
          %v421 = vld [vmem:[%s3] sm:$0xff]
          %v422 = vld [vmem:[%s4] sm:$0xff]
          %424 = vset.pattern.permute.xlu0 0
          %425 = vperm.xlu0 %424, %v421
          %v426 = vpop.permute.xlu0 %425
          %v428 = vlaneseq
          %v429 = vshrl.u32 %v428, 7
          %v430 = vsub.s32 0, %v429
          %v431 = vrot.slane %v422, %v430
          %v432 = vsub.f32 %v426, %v431
          %v433 = vand.u32 2147483647, %v432
          %434 = vset.pattern.permute.xlu0 1
          %435 = vperm.xlu0 %434, %v421
          %v436 = vpop.permute.xlu0 %435
          %v438 = vlaneseq
          %v439 = vshrl.u32 %v438, 7
          %v440 = vsub.s32 1, %v439
          %v441 = vrot.slane %v422, %v440
          %v442 = vsub.f32 %v436, %v441
          %v443 = vand.u32 2147483647, %v442
          %v444 = vadd.f32 %v433, %v443
          %445 = vset.pattern.permute.xlu0 2
          %446 = vperm.xlu0 %445, %v421
          %v447 = vpop.permute.xlu0 %446
          %v449 = vlaneseq
          %v450 = vshrl.u32 %v449, 7
          %v451 = vsub.s32 2, %v450
          %v452 = vrot.slane %v422, %v451
          %v453 = vsub.f32 %v447, %v452
          %v454 = vand.u32 2147483647, %v453
          %v455 = vadd.f32 %v444, %v454
          %456 = vset.pattern.permute.xlu0 3
          %457 = vperm.xlu0 %456, %v421
          %v458 = vpop.permute.xlu0 %457
          %v460 = vlaneseq
          %v461 = vshrl.u32 %v460, 7
          %v462 = vsub.s32 3, %v461
          %v463 = vrot.slane %v422, %v462
          %v464 = vsub.f32 %v458, %v463
          %v465 = vand.u32 2147483647, %v464
          %466 = vset.pattern.permute.xlu0 4
          %467 = vperm.xlu0 %466, %v421
          %v468 = vpop.permute.xlu0 %467
          %v470 = vlaneseq
          %v471 = vshrl.u32 %v470, 7
          %v472 = vsub.s32 4, %v471
          %v473 = vrot.slane %v422, %v472
          %v474 = vsub.f32 %v468, %v473
          %v475 = vand.u32 2147483647, %v474
          %v476 = vadd.f32 %v465, %v475
          %477 = vset.pattern.permute.xlu0 5
          %478 = vperm.xlu0 %477, %v421
          %v479 = vpop.permute.xlu0 %478
          %v481 = vlaneseq
          %v482 = vshrl.u32 %v481, 7
          %v483 = vsub.s32 5, %v482
          %v484 = vrot.slane %v422, %v483
          %v485 = vsub.f32 %v479, %v484
          %v486 = vand.u32 2147483647, %v485
          %487 = vset.pattern.permute.xlu0 6
          %488 = vperm.xlu0 %487, %v421
          %v489 = vpop.permute.xlu0 %488
          %v491 = vlaneseq
          %v492 = vshrl.u32 %v491, 7
          %v493 = vsub.s32 6, %v492
          %v494 = vrot.slane %v422, %v493
          %v495 = vsub.f32 %v489, %v494
          %v496 = vand.u32 2147483647, %v495
          %v497 = vadd.f32 %v486, %v496
          %v498 = vmul.f32 %v476, 0.1
          %v499 = vadd.f32 %v455, %v498
          %500 = vst [vmem:[%s409] sm:$0xff] %v499
          %s501 = scalar_lea.vmem %s409, 8
          %502 = vst [vmem:[%s501] sm:$0xff] %v455
          %s503 = scalar_lea.vmem %s409, 16
          %504 = vst [vmem:[%s503] sm:$0xff] %v476
          %s505 = scalar_lea.vmem %s409, 24
          %506 = vst [vmem:[%s505] sm:$0xff] %v497
        $region52: #{_volsdf_forward.1} parent=43 // pred_fallthru
          _
        %p507 = scmp.lt.s32.totalorder %s410, 1
        // Predicated region
        $region53: #{_volsdf_forward.1} parent=43 // pred_check
          %p508 = pneg %p507
        $region54: #{_volsdf_forward.1} parent=43 // pred_check_branch
          %510 = sbr.rel (%p508) target = $region56
        $region55: #{_volsdf_forward.1} parent=43 // pred_region
          %v511 = vld [vmem:[%s377] sm:$0xff]
          %s512 = scalar_lea.vmem %s377, 8
          %v513 = vld [vmem:[%s512] sm:$0xff]
          %s514 = scalar_lea.vmem %s377, 16
          %v515 = vld [vmem:[%s514] sm:$0xff]
          %s516 = scalar_lea.vmem %s377, 24
          %v517 = vld [vmem:[%s516] sm:$0xff]
          %s518 = scalar_lea.vmem %s377, 32
          %v519 = vld [vmem:[%s518] sm:$0xff]
          %s520 = scalar_lea.vmem %s377, 40
          %v521 = vld [vmem:[%s520] sm:$0xff]
          %s522 = scalar_lea.vmem %s377, 48
          %v523 = vld [vmem:[%s522] sm:$0xff]
          %s524 = scalar_lea.vmem %s377, 56
          %v525 = vld [vmem:[%s524] sm:$0xff]
          %s526 = scalar_lea.vmem %s377, 64
          %v527 = vld [vmem:[%s526] sm:$0xff]
          %s528 = scalar_lea.vmem %s377, 72
          %v529 = vld [vmem:[%s528] sm:$0xff]
          %s530 = scalar_lea.vmem %s377, 80
          %v531 = vld [vmem:[%s530] sm:$0xff]
          %s532 = scalar_lea.vmem %s377, 88
          %v533 = vld [vmem:[%s532] sm:$0xff]
          %s534 = scalar_lea.vmem %s377, 96
          %v535 = vld [vmem:[%s534] sm:$0xff]
          %s536 = scalar_lea.vmem %s377, 104
          %v537 = vld [vmem:[%s536] sm:$0xff]
          %v538 = vsub.f32 %v511, %v519
          %v539 = vsub.f32 %v513, %v521
          %v540 = vsub.f32 %v515, %v523
          %v541 = vsub.f32 %v517, %v525
          %v542 = vsub.f32 %v511, %v523
          %v543 = vsub.f32 %v513, %v525
          %v544 = vsub.f32 %v515, %v519
          %v545 = vsub.f32 %v517, %v521
          %v546 = vmul.f32 %v538, %v538
          %v547 = vmul.f32 %v539, %v539
          %v548 = vadd.f32 %v546, %v547
          %v549 = vmul.f32 %v540, %v540
          %v550 = vadd.f32 %v548, %v549
          %v551 = vmul.f32 %v541, %v541
          %v552 = vadd.f32 %v550, %v551
          %v553 = vmul.f32 %v542, %v542
          %v554 = vmul.f32 %v543, %v543
          %v555 = vadd.f32 %v553, %v554
          %v556 = vmul.f32 %v544, %v544
          %v557 = vadd.f32 %v555, %v556
          %v558 = vmul.f32 %v545, %v545
          %v559 = vadd.f32 %v557, %v558
          %v560 = vand.u32 2147483647, %v538
          %v561 = vand.u32 2147483647, %v539
          %v562 = vadd.f32 %v560, %v561
          %v563 = vand.u32 2147483647, %v540
          %v564 = vadd.f32 %v562, %v563
          %v565 = vand.u32 2147483647, %v541
          %v566 = vadd.f32 %v564, %v565
          %v567 = vmul.f32 %v566, 0.25
          %v568 = vand.u32 2147483647, %v542
          %v569 = vand.u32 2147483647, %v543
          %v570 = vadd.f32 %v568, %v569
          %v571 = vand.u32 2147483647, %v544
          %v572 = vadd.f32 %v570, %v571
          %v573 = vand.u32 2147483647, %v545
          %v574 = vadd.f32 %v572, %v573
          %v575 = vmul.f32 %v574, 0.25
          %vm576 = vcmp.lt.f32.partialorder %v552, %v559
          %v577 = vsel %vm576, %v567, %v575
          %vm578 = vcmp.lt.f32.partialorder %v577, 100.0
          %v579 = vsel %vm578, %v537, 0.0
          %v580 = vmul.f32 %v535, %v579
          %s581 = sld [smem:[#allocation8]]
          %s582 = sld [smem:[#allocation8 + $0x1]]
          %s583 = sld [smem:[#allocation8 + $0x2]]
          %s584 = sld [smem:[#allocation8 + $0x80]]
          %s585 = sld [smem:[#allocation8 + $0x81]]
          %s586 = sld [smem:[#allocation8 + $0x82]]
          %s587 = sld [smem:[#allocation8 + $0x100]]
          %s588 = sld [smem:[#allocation8 + $0x101]]
          %s589 = sld [smem:[#allocation8 + $0x102]]
          %v590 = vstv %s587
          %v591 = vmul.f32 %v590, %v519
          %v592 = vstv %s588
          %v593 = vmul.f32 %v592, %v521
          %v594 = vadd.f32 %v591, %v593
          %v595 = vstv %s589
          %v596 = vadd.f32 %v594, %v595
          %v597 = vrcp.pop %v596
          %v598 = vstv %s581
          %v599 = vmul.f32 %v598, %v519
          %v600 = vstv %s582
          %v601 = vmul.f32 %v600, %v521
          %v602 = vadd.f32 %v599, %v601
          %v603 = vstv %s583
          %v604 = vadd.f32 %v602, %v603
          %v605 = vmul.f32 %v604, %v597
          %v606 = vstv %s584
          %v607 = vmul.f32 %v606, %v519
          %v608 = vstv %s585
          %v609 = vmul.f32 %v608, %v521
          %v610 = vadd.f32 %v607, %v609
          %v611 = vstv %s586
          %v612 = vadd.f32 %v610, %v611
          %v613 = vmul.f32 %v612, %v597
          %v614 = vmul.f32 %v590, %v523
          %v615 = vmul.f32 %v592, %v525
          %v616 = vadd.f32 %v614, %v615
          %v617 = vadd.f32 %v616, %v595
          %v618 = vrcp.pop %v617
          %v619 = vmul.f32 %v598, %v523
          %v620 = vmul.f32 %v600, %v525
          %v621 = vadd.f32 %v619, %v620
          %v622 = vadd.f32 %v621, %v603
          %v623 = vmul.f32 %v622, %v618
          %v624 = vmul.f32 %v606, %v523
          %v625 = vmul.f32 %v608, %v525
          %v626 = vadd.f32 %v624, %v625
          %v627 = vadd.f32 %v626, %v611
          %v628 = vmul.f32 %v627, %v618
          %v629 = vsub.f32 %v527, %v605
          %v630 = vsub.f32 %v529, %v613
          %v631 = vsub.f32 %v531, %v623
          %v632 = vsub.f32 %v533, %v628
          %v633 = vsub.f32 %v527, %v623
          %v634 = vsub.f32 %v529, %v628
          %v635 = vsub.f32 %v531, %v605
          %v636 = vsub.f32 %v533, %v613
          %v637 = vmul.f32 %v629, %v629
          %v638 = vmul.f32 %v630, %v630
          %v639 = vadd.f32 %v637, %v638
          %v640 = vmul.f32 %v631, %v631
          %v641 = vadd.f32 %v639, %v640
          %v642 = vmul.f32 %v632, %v632
          %v643 = vadd.f32 %v641, %v642
          %v644 = vmul.f32 %v633, %v633
          %v645 = vmul.f32 %v634, %v634
          %v646 = vadd.f32 %v644, %v645
          %v647 = vmul.f32 %v635, %v635
          %v648 = vadd.f32 %v646, %v647
          %v649 = vmul.f32 %v636, %v636
          %v650 = vadd.f32 %v648, %v649
          %v651 = vand.u32 2147483647, %v629
          %v652 = vand.u32 2147483647, %v630
          %v653 = vadd.f32 %v651, %v652
          %v654 = vand.u32 2147483647, %v631
          %v655 = vadd.f32 %v653, %v654
          %v656 = vand.u32 2147483647, %v632
          %v657 = vadd.f32 %v655, %v656
          %v658 = vmul.f32 %v657, 0.25
          %v659 = vand.u32 2147483647, %v633
          %v660 = vand.u32 2147483647, %v634
          %v661 = vadd.f32 %v659, %v660
          %v662 = vand.u32 2147483647, %v635
          %v663 = vadd.f32 %v661, %v662
          %v664 = vand.u32 2147483647, %v636
          %v665 = vadd.f32 %v663, %v664
          %v666 = vmul.f32 %v665, 0.25
          %vm667 = vcmp.lt.f32.partialorder %v643, %v650
          %v668 = vsel %vm667, %v658, %v666
          %vm669 = vcmp.gt.f32.partialorder %v537, 0.0
          %v670 = vsel %vm669, %v668, 0.0
          %vm671 = vcmp.lt.f32.partialorder %v670, 100.0
          %v672 = vsel %vm671, %v537, 0.0
          %v673 = vld [vmem:[#allocation2] sm:$0xff]
          %v674 = vmul.f32 %v577, %v580
          %v675 = vadd.f32 %v673, %v674
          %676 = vst [vmem:[#allocation2] sm:$0xff] %v675
          %v677 = vld [vmem:[#allocation3] sm:$0xff]
          %v678 = vadd.f32 %v677, %v579
          %679 = vst [vmem:[#allocation3] sm:$0xff] %v678
          %v680 = vld [vmem:[#allocation4] sm:$0xff]
          %v681 = vmul.f32 %v670, %v580
          %v682 = vmul.f32 %v681, %v672
          %v683 = vadd.f32 %v680, %v682
          %684 = vst [vmem:[#allocation4] sm:$0xff] %v683
          %v685 = vld [vmem:[#allocation5] sm:$0xff]
          %v686 = vadd.f32 %v685, %v672
          %687 = vst [vmem:[#allocation5] sm:$0xff] %v686
          %v688 = vld [vmem:[#allocation6] sm:$0xff]
          %v689 = vld [vmem:[%s387] sm:$0xff]
          %s690 = scalar_lea.vmem %s387, 24
          %v691 = vld [vmem:[%s690] sm:$0xff]
          %v692 = vsub.f32 %v689, %v691
          %v693 = vand.u32 2147483647, %v692
          %s694 = scalar_lea.vmem %s387, 8
          %v695 = vld [vmem:[%s694] sm:$0xff]
          %s696 = scalar_lea.vmem %s387, 32
          %v697 = vld [vmem:[%s696] sm:$0xff]
          %v698 = vsub.f32 %v695, %v697
          %v699 = vand.u32 2147483647, %v698
          %v700 = vadd.f32 %v693, %v699
          %s701 = scalar_lea.vmem %s387, 16
          %v702 = vld [vmem:[%s701] sm:$0xff]
          %s703 = scalar_lea.vmem %s387, 40
          %v704 = vld [vmem:[%s703] sm:$0xff]
          %v705 = vsub.f32 %v702, %v704
          %v706 = vand.u32 2147483647, %v705
          %v707 = vadd.f32 %v700, %v706
          %v708 = vadd.f32 %v688, %v707
          %709 = vst [vmem:[#allocation6] sm:$0xff] %v708
          %v710 = vld [vmem:[%s397] sm:$0xff]
          %s711 = scalar_lea.vmem %s397, 8
          %v712 = vld [vmem:[%s711] sm:$0xff]
          %s713 = scalar_lea.vmem %s397, 16
          %v714 = vld [vmem:[%s713] sm:$0xff]
          %v715 = vmul.f32 %v710, %v710
          %v716 = vmul.f32 %v712, %v712
          %v717 = vadd.f32 %v715, %v716
          %v718 = vmul.f32 %v714, %v714
          %v719 = vadd.f32 %v717, %v718
          %v720 = vrsqrt.pop %v719
          %v721 = vmul.f32 %v719, %v720
          %vm722 = vcmp.eq.f32.partialorder %v719, inf
          %v723 = vsel %vm722, %v719, %v721
          %vm724 = vcmp.eq.f32.partialorder %v719, 0.0
          %v725 = vand.u32 %v719, 2147483648
          %v726 = vsel %vm724, %v725, %v723
          %v727 = vld [vmem:[#allocation7] sm:$0xff]
          %v728 = vsub.f32 %v726, 1.0
          %v729 = vmul.f32 %v728, %v728
          %v730 = vadd.f32 %v727, %v729
          %731 = vst [vmem:[#allocation7] sm:$0xff] %v730
        $region56: #{_volsdf_forward.1} parent=43 // pred_fallthru
          _
        // Predicated region
        $region57: #{_volsdf_forward.1} parent=43 // pred_check
          %p732 = pneg %p411
        $region58: #{_volsdf_forward.1} parent=43 // pred_check_branch
          %734 = sbr.rel (%p732) target = $region60
        $region59: #{_volsdf_forward.1} parent=43 // pred_region
          %v735 = vlaneseq
          %v736 = vand.u32 %v735, 127
          %v737 = vld [vmem:[#allocation2] sm:$0xff]
          %738 = vadd.xlane.f32.xlu0 %v737
          %v739 = vpop.xlane.xlu0 %738
          %v740 = vrot.slane %v739, 4
          %v741 = vadd.f32 %v739, %v740
          %v742 = vrot.slane %v741, 2
          %v743 = vadd.f32 %v741, %v742
          %v744 = vrot.slane %v743, 1
          %v745 = vadd.f32 %v743, %v744
          %vm746 = vcmp.eq.s32.totalorder %v736, 0
          %v747 = vsel %vm746, %v745, 0.0
          %v748 = vld [vmem:[#allocation3] sm:$0xff]
          %749 = vadd.xlane.f32.xlu0 %v748
          %v750 = vpop.xlane.xlu0 %749
          %v751 = vrot.slane %v750, 4
          %v752 = vadd.f32 %v750, %v751
          %v753 = vrot.slane %v752, 2
          %v754 = vadd.f32 %v752, %v753
          %v755 = vrot.slane %v754, 1
          %v756 = vadd.f32 %v754, %v755
          %vm757 = vcmp.eq.s32.totalorder %v736, 1
          %v758 = vsel %vm757, %v756, 0.0
          %v759 = vadd.f32 %v747, %v758
          %v760 = vld [vmem:[#allocation4] sm:$0xff]
          %761 = vadd.xlane.f32.xlu0 %v760
          %v762 = vpop.xlane.xlu0 %761
          %v763 = vrot.slane %v762, 4
          %v764 = vadd.f32 %v762, %v763
          %v765 = vrot.slane %v764, 2
          %v766 = vadd.f32 %v764, %v765
          %v767 = vrot.slane %v766, 1
          %v768 = vadd.f32 %v766, %v767
          %vm769 = vcmp.eq.s32.totalorder %v736, 2
          %v770 = vsel %vm769, %v768, 0.0
          %v771 = vadd.f32 %v759, %v770
          %v772 = vld [vmem:[#allocation5] sm:$0xff]
          %773 = vadd.xlane.f32.xlu0 %v772
          %v774 = vpop.xlane.xlu0 %773
          %v775 = vrot.slane %v774, 4
          %v776 = vadd.f32 %v774, %v775
          %v777 = vrot.slane %v776, 2
          %v778 = vadd.f32 %v776, %v777
          %v779 = vrot.slane %v778, 1
          %v780 = vadd.f32 %v778, %v779
          %vm781 = vcmp.eq.s32.totalorder %v736, 3
          %v782 = vsel %vm781, %v780, 0.0
          %v783 = vadd.f32 %v771, %v782
          %v784 = vld [vmem:[#allocation6] sm:$0xff]
          %785 = vadd.xlane.f32.xlu0 %v784
          %v786 = vpop.xlane.xlu0 %785
          %v787 = vrot.slane %v786, 4
          %v788 = vadd.f32 %v786, %v787
          %v789 = vrot.slane %v788, 2
          %v790 = vadd.f32 %v788, %v789
          %v791 = vrot.slane %v790, 1
          %v792 = vadd.f32 %v790, %v791
          %vm793 = vcmp.eq.s32.totalorder %v736, 4
          %v794 = vsel %vm793, %v792, 0.0
          %v795 = vadd.f32 %v783, %v794
          %v796 = vld [vmem:[#allocation7] sm:$0xff]
          %797 = vadd.xlane.f32.xlu0 %v796
          %v798 = vpop.xlane.xlu0 %797
          %v799 = vrot.slane %v798, 4
          %v800 = vadd.f32 %v798, %v799
          %v801 = vrot.slane %v800, 2
          %v802 = vadd.f32 %v800, %v801
          %v803 = vrot.slane %v802, 1
          %v804 = vadd.f32 %v802, %v803
          %vm805 = vcmp.eq.s32.totalorder %v736, 5
          %v806 = vsel %vm805, %v804, 0.0
          %v807 = vadd.f32 %v795, %v806
          %808 = vst [vmem:[%s404] sm:$0xff] %v807
        $region60: #{_volsdf_forward.1} parent=43 // pred_fallthru
          _
        %p809 = scmp.lt.s32.totalorder %s24, 1
        %s810 = scalar_select %p809, %s24, 1
        %s811 = smul.addr %s810, 8
        %s812 = scalar_lea.vmem %s6, %s811
        %p813 = scmp.lt.s32.totalorder %s24, 1
        %s814 = scalar_select %p813, %s24, 1
        %s815 = smul.addr %s814, 4
        %s816 = smul.addr %s815, 8
        %s817 = scalar_lea.vmem %s7, %s816
        // Predicated region
        $region61: #{_volsdf_forward.1} parent=43 // pred_check
          %p818 = pneg %p209
        $region62: #{_volsdf_forward.1} parent=43 // pred_check_branch
          %820 = sbr.rel (%p818) target = $region64
        $region63: #{_volsdf_forward.1} parent=43 // pred_region
          _
        $region64: #{_volsdf_forward.1} parent=43 // pred_fallthru
          _
        // Predicated region
        $region65: #{_volsdf_forward.1} parent=43 // pred_check
          %p821 = pneg %p235
        $region66: #{_volsdf_forward.1} parent=43 // pred_check_branch
          %823 = sbr.rel (%p821) target = $region68
        $region67: #{_volsdf_forward.1} parent=43 // pred_region
          _
        $region68: #{_volsdf_forward.1} parent=43 // pred_fallthru
          _
      $region44: #{_volsdf_forward.1} parent=5 // pred_fallthru
        _
      %p824 = scmp.le.s32.totalorder 2, %s15
      // Predicated region
      $region69: #{_volsdf_forward.1} parent=5 // pred_check
        %p825 = pneg %p824
      $region70: #{_volsdf_forward.1} parent=5 // pred_check_branch
        %827 = sbr.rel (%p825) target = $region72
      $region71: #{_volsdf_forward.1} parent=5 // pred_region
        %s828 = ssub.s32 %s15, 2
        // Predicated region
        $region73: #{_volsdf_forward.1} parent=71 // pred_check
          %p829 = pneg %p215
        $region74: #{_volsdf_forward.1} parent=71 // pred_check_branch
          %831 = sbr.rel (%p829) target = $region76
        $region75: #{_volsdf_forward.1} parent=71 // pred_region
          %p832 = scmp.lt.s32.totalorder %s26, 1
          %s833 = scalar_select %p832, %s26, 1
          %s834 = smul.addr %s833, 8
          %s835 = scalar_lea.vmem %s6, %s834
        $region76: #{_volsdf_forward.1} parent=71 // pred_fallthru
          _
        // Predicated region
        $region77: #{_volsdf_forward.1} parent=71 // pred_check
          %p836 = pneg %p241
        $region78: #{_volsdf_forward.1} parent=71 // pred_check_branch
          %838 = sbr.rel (%p836) target = $region80
        $region79: #{_volsdf_forward.1} parent=71 // pred_region
          %p839 = scmp.lt.s32.totalorder %s26, 1
          %s840 = scalar_select %p839, %s26, 1
          %s841 = smul.addr %s840, 4
          %s842 = smul.addr %s841, 8
          %s843 = scalar_lea.vmem %s7, %s842
        $region80: #{_volsdf_forward.1} parent=71 // pred_fallthru
          _
      $region72: #{_volsdf_forward.1} parent=5 // pred_fallthru
        _
    $region6: #{_volsdf_forward.1} parent=1 // loop_footer
      %s19 = sadd.s32 1, %s15
    $region7: #{_volsdf_forward.1} parent=1 // loop_footer_branch
      %14 = sbr.rel target = $region3
    $region8: #{_volsdf_forward.1} parent=1 // loop_exit
      _
    %844 = vsyncpa [#allocation9], 1
    %s845 = scalar_lea.sflag [#allocation9], 1
    %846 = vsyncpa %s845, 1

</llo_original>
